<compile_context>
chip_gen: v6e
topology: v6e:2x2x1
jax: 0.10.0
libtpu: 0.0.40
codegen_flags: <defaults>
</compile_context>

<pallas_src>
import math

import jax
import jax.numpy as jnp
from jax.experimental import pallas as pl
from jax.experimental.pallas import tpu as pltpu

STRIDES = [5, 4, 2, 2, 2]
KERNELS = [10, 8, 4, 4, 4]
PADS = [math.ceil(s / 2) for s in STRIDES]   # Conv1d padding = ceil(stride/2)


def _conv_out_len(t_in, k, s, p):
    return (t_in + 2 * p - k) // s + 1


def _build_plan(T):
    """Static per-layer (K, stride, pad, T_in, T_out) + layer-0 s2d row count."""
    plan = []
    t = T
    for k, s, p in zip(KERNELS, STRIDES, PADS):
        t_out = _conv_out_len(t, k, s, p)
        plan.append((k, s, p, t, t_out))
        t = t_out
    plan = tuple(plan)

    k0, s0, p0, t0_in, t0_out = plan[0]
    # layer-0 space-to-depth relies on K0 == 2*stride0 so each output row
    # reads exactly two consecutive packed super-rows.
    assert k0 == 2 * s0, "layer-0 space-to-depth requires K0 == 2*stride0"
    n_rows = max(-(-(t0_in + p0) // s0), t0_out + 1)      # ceil divisions
    assert s0 * n_rows - p0 - t0_in >= 0
    # layers 1..4: every strided im2col read must stay inside the padded buf.
    for (k, s, p, t_in, t_out) in plan[1:]:
        assert (t_out - 1) * s + (k - 1) <= t_in + 2 * p - 1, \
            "im2col read would overrun the padded scratch buffer"
    return plan, n_rows


# ------------------------------ fused kernel ------------------------------- #

def _make_kernel(plan, c_in, n_hidden):
    (k0, s0, p0, t0_in, t0_out) = plan[0]
    half = s0 * c_in                     # rows of w0 per 5-tap group (=400)
    tail = plan[1:]

    def kernel(x_ref, w0_ref, w1_ref, w2_ref, w3_ref, w4_ref,
               fcw_ref, fcb_ref, o_ref, *scratch):
        # ---- layer 0: stride folded into layout -> 2 contiguous matmuls ----
        xa = x_ref[0, 0:t0_out, :]                    # super-rows t
        xb = x_ref[0, 1:t0_out + 1, :]                # super-rows t+1
        h = jnp.dot(xa, w0_ref[0:half, :], preferred_element_type=jnp.float32)
        h = h + jnp.dot(xb, w0_ref[half:2 * half, :],
                        preferred_element_type=jnp.float32)
        h = jnp.maximum(h, 0.0)                       # ReLU (Dropout p=0 no-op)

        # ---- layers 1..4: pad -> im2col scratch -> ONE matmul per layer ----
        w_tail = (w1_ref, w2_ref, w3_ref, w4_ref)
        for li, (kk, ss, pp, t_in, t_out) in enumerate(tail):
            hbuf = scratch[2 * li]                    # (t_in + 2p, 32)
            col = scratch[2 * li + 1]                 # (t_out, kk*32)
            zpad = jnp.zeros((pp, n_hidden), jnp.float32)
            hbuf[0:pp, :] = zpad
            hbuf[pp:pp + t_in, :] = h
            hbuf[pp + t_in:pp + t_in + pp, :] = zpad
            for k in range(kk):
                col[:, k * n_hidden:(k + 1) * n_hidden] = (
                    hbuf[pl.ds(k, t_out, stride=ss), :])
            h = jnp.maximum(
                jnp.dot(col[...], w_tail[li][...],
                        preferred_element_type=jnp.float32), 0.0)

        # ---- final Linear over channels ----
        y = jnp.dot(h, fcw_ref[...], preferred_element_type=jnp.float32)
        o_ref[0] = (y + fcb_ref[...]).astype(o_ref.dtype)

    return kernel


# -------------------------------- forward ---------------------------------- #

def ihc_cpc_forward(params, x, cast_conv0_bf16=False):
    """x: (B, 80, T) IHC-gram in NCL layout (input to the CPC conv stack).
    Returns (B, n_classes, T_final), matching the PyTorch module's output."""
    # TODO(synk): the frozen pretrained WaveNet IHC predictor, its yaml config
    # and the comp/invcomp ihcogram scaling require external files and are not
    # reproduced; `x` here is the 80-channel IHC-gram fed to the CPC encoder.
    # TODO(synk): pad_packed_sequence (variable-length packing) has no Pallas
    # equivalent; this wrapper takes an already-padded dense batch.
    B, c_in, T = x.shape
    n_hidden = params["convs"][0].shape[2]
    n_classes = params["fc_w"].shape[1]

    plan, n_rows = _build_plan(T)
    (k0, s0, p0, _, t0_out) = plan[0]
    t_final = plan[-1][4]

    # One fused relayout pass: pad time, fold the layer-0 stride into the lane
    # axis (space-to-depth) and go channels-last.
    pad_r = s0 * n_rows - p0 - T
    xp = jnp.pad(x, ((0, 0), (0, 0), (p0, pad_r)))            # (B, C, s0*R)
    xp = xp.reshape(B, c_in, n_rows, s0)
    x_s2d = jnp.transpose(xp, (0, 2, 3, 1)).reshape(B, n_rows, s0 * c_in)

    # Conv weights flattened (tap-major, channel-minor) for single-matmul use.
    w_flat = [w.reshape(-1, w.shape[2]) for w in params["convs"]]
    if cast_conv0_bf16:   # v5e knob: bf16 operands, f32 accumulation
        x_s2d = x_s2d.astype(jnp.bfloat16)
        w_flat[0] = w_flat[0].astype(jnp.bfloat16)

    in_specs = [pl.BlockSpec((1, n_rows, s0 * c_in), lambda b: (b, 0, 0))]
    in_specs += [pl.BlockSpec(w.shape, lambda b: (0, 0)) for w in w_flat]
    in_specs += [pl.BlockSpec(params["fc_w"].shape, lambda b: (0, 0)),
                 pl.BlockSpec(params["fc_b"].shape, lambda b: (0, 0))]

    scratch_shapes = []
    for (kk, ss, pp, t_in, t_out) in plan[1:]:
        scratch_shapes.append(pltpu.VMEM((t_in + 2 * pp, n_hidden), jnp.float32))
        scratch_shapes.append(pltpu.VMEM((t_out, kk * n_hidden), jnp.float32))

    y = pl.pallas_call(
        _make_kernel(plan, c_in, n_hidden),
        out_shape=jax.ShapeDtypeStruct((B, t_final, n_classes), x.dtype),
        grid=(B,),
        in_specs=in_specs,
        out_specs=pl.BlockSpec((1, t_final, n_classes), lambda b: (b, 0, 0)),
        scratch_shapes=scratch_shapes,
        compiler_params=pltpu.CompilerParams(
            dimension_semantics=("parallel",)),
    )(x_s2d, *w_flat, params["fc_w"], params["fc_b"])

    return jnp.transpose(y, (0, 2, 1))      # (B, n_classes, T_final)


# ------------------------------ parameters --------------------------------- #

def init_params(key, n_hidden=32, n_classes=39, in_d=80):
    """Deterministic synthetic parameters matching IHC_Cpc.__init__ shapes."""
    params = {"convs": []}
    c = in_d
    for k in KERNELS:
        key, sub = jax.random.split(key)
        std = math.sqrt(2.0 / (c * k))      # kaiming_normal_ (fan_in, relu gain)
        params["convs"].append(
            std * jax.random.normal(sub, (k, c, n_hidden), dtype=jnp.float32))
        c = n_hidden
    key, kw, kb = jax.random.split(key, 3)
    bound = 1.0 / math.sqrt(n_hidden)
    params["fc_w"] = jax.random.uniform(kw, (n_hidden, n_classes),
                                        jnp.float32, -bound, bound)
    params["fc_b"] = jax.random.uniform(kb, (1, n_classes),
                                        jnp.float32, -bound, bound)
    return params


# ------------------------------- reference --------------------------------- #

def reference_forward(params, x):
    """Pure-jnp reference (pad + im2col gather) for a correctness check."""
    h = jnp.transpose(x, (0, 2, 1))
    for w, s, p, k in zip(params["convs"], STRIDES, PADS, KERNELS):
        B, t_in, c = h.shape
        hp = jnp.pad(h, ((0, 0), (p, p), (0, 0)))
        t_out = _conv_out_len(t_in, k, s, p)
        idx = jnp.arange(t_out)[:, None] * s + jnp.arange(k)[None, :]
        patches = hp[:, idx, :].reshape(B, t_out, k * c)
        h = jnp.maximum(patches @ w.reshape(k * c, -1), 0.0)
    y = h @ params["fc_w"] + params["fc_b"]
    return jnp.transpose(y, (0, 2, 1))


# ---------------------------------- main ------------------------------------ #

if __name__ == "__main__":
    key = jax.random.PRNGKey(0)
    kx, kp = jax.random.split(key)

    B, C_IN, T = 2, 80, 800          # 80 IHC channels fixed by the module
    N_HIDDEN, N_CLASSES = 32, 39     # small hidden width; n_classes from module

    x = jax.random.normal(kx, (B, C_IN, T), dtype=jnp.float32)
    params = init_params(kp, n_hidden=N_HIDDEN, n_classes=N_CLASSES, in_d=C_IN)

    y = jax.jit(ihc_cpc_forward)(params, x)
    jax.block_until_ready(y)

    # total stride = 5*4*2*2*2 = 160 -> T_final = 5 for T = 800
    assert y.shape == (B, N_CLASSES, 5), y.shape

    y_ref = jax.jit(reference_forward)(params, x)
    err = float(jnp.max(jnp.abs(y - y_ref)))
    assert err < 2e-3, f"max abs err vs reference: {err}"

    print("KERNEL_OK")
</pallas_src>

<mosaic_0001>
module attributes {stable_mosaic.version = 11 : i64} {
  func.func @kernel(%arg0: i32, %arg1: memref<1x161x400xf32, #tpu.memory_space<vmem>>, %arg2: memref<800x32xf32, #tpu.memory_space<vmem>>, %arg3: memref<256x32xf32, #tpu.memory_space<vmem>>, %arg4: memref<128x32xf32, #tpu.memory_space<vmem>>, %arg5: memref<128x32xf32, #tpu.memory_space<vmem>>, %arg6: memref<128x32xf32, #tpu.memory_space<vmem>>, %arg7: memref<32x39xf32, #tpu.memory_space<vmem>>, %arg8: memref<1x39xf32, #tpu.memory_space<vmem>>, %arg9: memref<1x5x39xf32, #tpu.memory_space<vmem>>, %arg10: memref<164x32xf32, #tpu.memory_space<vmem>>, %arg11: memref<40x256xf32, #tpu.memory_space<vmem>>, %arg12: memref<42x32xf32, #tpu.memory_space<vmem>>, %arg13: memref<20x128xf32, #tpu.memory_space<vmem>>, %arg14: memref<22x32xf32, #tpu.memory_space<vmem>>, %arg15: memref<10x128xf32, #tpu.memory_space<vmem>>, %arg16: memref<12x32xf32, #tpu.memory_space<vmem>>, %arg17: memref<5x128xf32, #tpu.memory_space<vmem>>) attributes {dimension_semantics = [#tpu.dimension_semantics<parallel>], iteration_bounds = array<i64: 2>, scalar_prefetch = 0 : i64, scratch_operands = 8 : i64, tpu.core_type = #tpu.core_type<tc>, window_params = [{transform_indices = @transform_0, window_bounds = array<i64: 1, 161, 400>}, {pipeline_mode = #tpu.pipeline_mode<synchronous>, transform_indices = @transform_1, window_bounds = array<i64: 800, 32>}, {pipeline_mode = #tpu.pipeline_mode<synchronous>, transform_indices = @transform_2, window_bounds = array<i64: 256, 32>}, {pipeline_mode = #tpu.pipeline_mode<synchronous>, transform_indices = @transform_3, window_bounds = array<i64: 128, 32>}, {pipeline_mode = #tpu.pipeline_mode<synchronous>, transform_indices = @transform_4, window_bounds = array<i64: 128, 32>}, {pipeline_mode = #tpu.pipeline_mode<synchronous>, transform_indices = @transform_5, window_bounds = array<i64: 128, 32>}, {pipeline_mode = #tpu.pipeline_mode<synchronous>, transform_indices = @transform_6, window_bounds = array<i64: 32, 39>}, {pipeline_mode = #tpu.pipeline_mode<synchronous>, transform_indices = @transform_7, window_bounds = array<i64: 1, 39>}, {transform_indices = @transform_8, window_bounds = array<i64: 1, 5, 39>}]} {
    %c0 = arith.constant 0 : index
    %c0_0 = arith.constant 0 : index
    %c0_1 = arith.constant 0 : index
    %0 = vector.load %arg1[%c0, %c0_0, %c0_1] : memref<1x161x400xf32, #tpu.memory_space<vmem>>, vector<1x160x400xf32>
    %1 = vector.shape_cast %0 : vector<1x160x400xf32> to vector<160x400xf32>
    %c0_2 = arith.constant 0 : index
    %c1 = arith.constant 1 : index
    %c0_3 = arith.constant 0 : index
    %2 = vector.load %arg1[%c0_2, %c1, %c0_3] : memref<1x161x400xf32, #tpu.memory_space<vmem>>, vector<1x160x400xf32>
    %3 = vector.shape_cast %2 : vector<1x160x400xf32> to vector<160x400xf32>
    %c0_4 = arith.constant 0 : index
    %c0_5 = arith.constant 0 : index
    %4 = vector.load %arg2[%c0_4, %c0_5] : memref<800x32xf32, #tpu.memory_space<vmem>>, vector<400x32xf32>
    %cst = arith.constant dense<0.000000e+00> : vector<160x32xf32>
    %5 = tpu.matmul %1, %4, %cst {dimension_numbers = #tpu.dot_dimension_numbers<[1], [0], [0], [1], [0, 0, 1, 1], [], []>} : vector<160x400xf32>, vector<400x32xf32>, vector<160x32xf32> -> vector<160x32xf32>
    %c400 = arith.constant 400 : index
    %c0_6 = arith.constant 0 : index
    %6 = vector.load %arg2[%c400, %c0_6] : memref<800x32xf32, #tpu.memory_space<vmem>>, vector<400x32xf32>
    %cst_7 = arith.constant dense<0.000000e+00> : vector<160x32xf32>
    %7 = tpu.matmul %3, %6, %cst_7 {dimension_numbers = #tpu.dot_dimension_numbers<[1], [0], [0], [1], [0, 0, 1, 1], [], []>} : vector<160x400xf32>, vector<400x32xf32>, vector<160x32xf32> -> vector<160x32xf32>
    %8 = arith.addf %5, %7 : vector<160x32xf32>
    %cst_8 = arith.constant 0.000000e+00 : f32
    %9 = vector.broadcast %cst_8 : f32 to vector<160x32xf32>
    %10 = arith.maximumf %8, %9 : vector<160x32xf32>
    %cst_9 = arith.constant 0.000000e+00 : f32
    %11 = vector.broadcast %cst_9 : f32 to vector<2x32xf32>
    %c0_10 = arith.constant 0 : index
    %c0_11 = arith.constant 0 : index
    %12 = vector.load %arg10[%c0_10, %c0_11] : memref<164x32xf32, #tpu.memory_space<vmem>>, vector<2x32xf32>
    tpu.vector_store %arg10[%c0_10, %c0_11], %11 {strides = array<i32>} : memref<164x32xf32, #tpu.memory_space<vmem>>, vector<2x32xf32>,
    %c2 = arith.constant 2 : index
    %c0_12 = arith.constant 0 : index
    %13 = vector.load %arg10[%c2, %c0_12] : memref<164x32xf32, #tpu.memory_space<vmem>>, vector<160x32xf32>
    tpu.vector_store %arg10[%c2, %c0_12], %10 {strides = array<i32>} : memref<164x32xf32, #tpu.memory_space<vmem>>, vector<160x32xf32>,
    %c162 = arith.constant 162 : index
    %c0_13 = arith.constant 0 : index
    %14 = vector.load %arg10[%c162, %c0_13] : memref<164x32xf32, #tpu.memory_space<vmem>>, vector<2x32xf32>
    tpu.vector_store %arg10[%c162, %c0_13], %11 {strides = array<i32>} : memref<164x32xf32, #tpu.memory_space<vmem>>, vector<2x32xf32>,
    %c0_14 = arith.constant 0 : index
    %c0_15 = arith.constant 0 : index
    %15 = tpu.strided_load %arg10[%c0_14, %c0_15] {strides = array<i32: 4, 1>} : memref<164x32xf32, #tpu.memory_space<vmem>>, vector<40x32xf32>
    %c0_16 = arith.constant 0 : index
    %c0_17 = arith.constant 0 : index
    %16 = vector.load %arg11[%c0_16, %c0_17] : memref<40x256xf32, #tpu.memory_space<vmem>>, vector<40x32xf32>
    tpu.vector_store %arg11[%c0_16, %c0_17], %15 {strides = array<i32>} : memref<40x256xf32, #tpu.memory_space<vmem>>, vector<40x32xf32>,
    %c1_18 = arith.constant 1 : index
    %c0_19 = arith.constant 0 : index
    %17 = tpu.strided_load %arg10[%c1_18, %c0_19] {strides = array<i32: 4, 1>} : memref<164x32xf32, #tpu.memory_space<vmem>>, vector<40x32xf32>
    %c0_20 = arith.constant 0 : index
    %c32 = arith.constant 32 : index
    %18 = vector.load %arg11[%c0_20, %c32] : memref<40x256xf32, #tpu.memory_space<vmem>>, vector<40x32xf32>
    tpu.vector_store %arg11[%c0_20, %c32], %17 {strides = array<i32>} : memref<40x256xf32, #tpu.memory_space<vmem>>, vector<40x32xf32>,
    %c2_21 = arith.constant 2 : index
    %c0_22 = arith.constant 0 : index
    %19 = tpu.strided_load %arg10[%c2_21, %c0_22] {strides = array<i32: 4, 1>} : memref<164x32xf32, #tpu.memory_space<vmem>>, vector<40x32xf32>
    %c0_23 = arith.constant 0 : index
    %c64 = arith.constant 64 : index
    %20 = vector.load %arg11[%c0_23, %c64] : memref<40x256xf32, #tpu.memory_space<vmem>>, vector<40x32xf32>
    tpu.vector_store %arg11[%c0_23, %c64], %19 {strides = array<i32>} : memref<40x256xf32, #tpu.memory_space<vmem>>, vector<40x32xf32>,
    %c3 = arith.constant 3 : index
    %c0_24 = arith.constant 0 : index
    %21 = tpu.strided_load %arg10[%c3, %c0_24] {strides = array<i32: 4, 1>} : memref<164x32xf32, #tpu.memory_space<vmem>>, vector<40x32xf32>
    %c0_25 = arith.constant 0 : index
    %c96 = arith.constant 96 : index
    %22 = vector.load %arg11[%c0_25, %c96] : memref<40x256xf32, #tpu.memory_space<vmem>>, vector<40x32xf32>
    tpu.vector_store %arg11[%c0_25, %c96], %21 {strides = array<i32>} : memref<40x256xf32, #tpu.memory_space<vmem>>, vector<40x32xf32>,
    %c4 = arith.constant 4 : index
    %c0_26 = arith.constant 0 : index
    %23 = tpu.strided_load %arg10[%c4, %c0_26] {strides = array<i32: 4, 1>} : memref<164x32xf32, #tpu.memory_space<vmem>>, vector<40x32xf32>
    %c0_27 = arith.constant 0 : index
    %c128 = arith.constant 128 : index
    %24 = vector.load %arg11[%c0_27, %c128] : memref<40x256xf32, #tpu.memory_space<vmem>>, vector<40x32xf32>
    tpu.vector_store %arg11[%c0_27, %c128], %23 {strides = array<i32>} : memref<40x256xf32, #tpu.memory_space<vmem>>, vector<40x32xf32>,
    %c5 = arith.constant 5 : index
    %c0_28 = arith.constant 0 : index
    %25 = tpu.strided_load %arg10[%c5, %c0_28] {strides = array<i32: 4, 1>} : memref<164x32xf32, #tpu.memory_space<vmem>>, vector<40x32xf32>
    %c0_29 = arith.constant 0 : index
    %c160 = arith.constant 160 : index
    %26 = vector.load %arg11[%c0_29, %c160] : memref<40x256xf32, #tpu.memory_space<vmem>>, vector<40x32xf32>
    tpu.vector_store %arg11[%c0_29, %c160], %25 {strides = array<i32>} : memref<40x256xf32, #tpu.memory_space<vmem>>, vector<40x32xf32>,
    %c6 = arith.constant 6 : index
    %c0_30 = arith.constant 0 : index
    %27 = tpu.strided_load %arg10[%c6, %c0_30] {strides = array<i32: 4, 1>} : memref<164x32xf32, #tpu.memory_space<vmem>>, vector<40x32xf32>
    %c0_31 = arith.constant 0 : index
    %c192 = arith.constant 192 : index
    %28 = vector.load %arg11[%c0_31, %c192] : memref<40x256xf32, #tpu.memory_space<vmem>>, vector<40x32xf32>
    tpu.vector_store %arg11[%c0_31, %c192], %27 {strides = array<i32>} : memref<40x256xf32, #tpu.memory_space<vmem>>, vector<40x32xf32>,
    %c7 = arith.constant 7 : index
    %c0_32 = arith.constant 0 : index
    %29 = tpu.strided_load %arg10[%c7, %c0_32] {strides = array<i32: 4, 1>} : memref<164x32xf32, #tpu.memory_space<vmem>>, vector<40x32xf32>
    %c0_33 = arith.constant 0 : index
    %c224 = arith.constant 224 : index
    %30 = vector.load %arg11[%c0_33, %c224] : memref<40x256xf32, #tpu.memory_space<vmem>>, vector<40x32xf32>
    tpu.vector_store %arg11[%c0_33, %c224], %29 {strides = array<i32>} : memref<40x256xf32, #tpu.memory_space<vmem>>, vector<40x32xf32>,
    %c0_34 = arith.constant 0 : index
    %c0_35 = arith.constant 0 : index
    %31 = vector.load %arg11[%c0_34, %c0_35] : memref<40x256xf32, #tpu.memory_space<vmem>>, vector<40x256xf32>
    %c0_36 = arith.constant 0 : index
    %c0_37 = arith.constant 0 : index
    %32 = vector.load %arg3[%c0_36, %c0_37] : memref<256x32xf32, #tpu.memory_space<vmem>>, vector<256x32xf32>
    %cst_38 = arith.constant dense<0.000000e+00> : vector<40x32xf32>
    %33 = tpu.matmul %31, %32, %cst_38 {dimension_numbers = #tpu.dot_dimension_numbers<[1], [0], [0], [1], [0, 0, 1, 1], [], []>} : vector<40x256xf32>, vector<256x32xf32>, vector<40x32xf32> -> vector<40x32xf32>
    %cst_39 = arith.constant 0.000000e+00 : f32
    %34 = vector.broadcast %cst_39 : f32 to vector<40x32xf32>
    %35 = arith.maximumf %33, %34 : vector<40x32xf32>
    %cst_40 = arith.constant 0.000000e+00 : f32
    %36 = vector.broadcast %cst_40 : f32 to vector<1x32xf32>
    %c0_41 = arith.constant 0 : index
    %c0_42 = arith.constant 0 : index
    %37 = vector.load %arg12[%c0_41, %c0_42] : memref<42x32xf32, #tpu.memory_space<vmem>>, vector<1x32xf32>
    tpu.vector_store %arg12[%c0_41, %c0_42], %36 {strides = array<i32>} : memref<42x32xf32, #tpu.memory_space<vmem>>, vector<1x32xf32>,
    %c1_43 = arith.constant 1 : index
    %c0_44 = arith.constant 0 : index
    %38 = vector.load %arg12[%c1_43, %c0_44] : memref<42x32xf32, #tpu.memory_space<vmem>>, vector<40x32xf32>
    tpu.vector_store %arg12[%c1_43, %c0_44], %35 {strides = array<i32>} : memref<42x32xf32, #tpu.memory_space<vmem>>, vector<40x32xf32>,
    %c41 = arith.constant 41 : index
    %c0_45 = arith.constant 0 : index
    %39 = vector.load %arg12[%c41, %c0_45] : memref<42x32xf32, #tpu.memory_space<vmem>>, vector<1x32xf32>
    tpu.vector_store %arg12[%c41, %c0_45], %36 {strides = array<i32>} : memref<42x32xf32, #tpu.memory_space<vmem>>, vector<1x32xf32>,
    %c0_46 = arith.constant 0 : index
    %c0_47 = arith.constant 0 : index
    %40 = tpu.strided_load %arg12[%c0_46, %c0_47] {strides = array<i32: 2, 1>} : memref<42x32xf32, #tpu.memory_space<vmem>>, vector<20x32xf32>
    %c0_48 = arith.constant 0 : index
    %c0_49 = arith.constant 0 : index
    %41 = vector.load %arg13[%c0_48, %c0_49] : memref<20x128xf32, #tpu.memory_space<vmem>>, vector<20x32xf32>
    tpu.vector_store %arg13[%c0_48, %c0_49], %40 {strides = array<i32>} : memref<20x128xf32, #tpu.memory_space<vmem>>, vector<20x32xf32>,
    %c1_50 = arith.constant 1 : index
    %c0_51 = arith.constant 0 : index
    %42 = tpu.strided_load %arg12[%c1_50, %c0_51] {strides = array<i32: 2, 1>} : memref<42x32xf32, #tpu.memory_space<vmem>>, vector<20x32xf32>
    %c0_52 = arith.constant 0 : index
    %c32_53 = arith.constant 32 : index
    %43 = vector.load %arg13[%c0_52, %c32_53] : memref<20x128xf32, #tpu.memory_space<vmem>>, vector<20x32xf32>
    tpu.vector_store %arg13[%c0_52, %c32_53], %42 {strides = array<i32>} : memref<20x128xf32, #tpu.memory_space<vmem>>, vector<20x32xf32>,
    %c2_54 = arith.constant 2 : index
    %c0_55 = arith.constant 0 : index
    %44 = tpu.strided_load %arg12[%c2_54, %c0_55] {strides = array<i32: 2, 1>} : memref<42x32xf32, #tpu.memory_space<vmem>>, vector<20x32xf32>
    %c0_56 = arith.constant 0 : index
    %c64_57 = arith.constant 64 : index
    %45 = vector.load %arg13[%c0_56, %c64_57] : memref<20x128xf32, #tpu.memory_space<vmem>>, vector<20x32xf32>
    tpu.vector_store %arg13[%c0_56, %c64_57], %44 {strides = array<i32>} : memref<20x128xf32, #tpu.memory_space<vmem>>, vector<20x32xf32>,
    %c3_58 = arith.constant 3 : index
    %c0_59 = arith.constant 0 : index
    %46 = tpu.strided_load %arg12[%c3_58, %c0_59] {strides = array<i32: 2, 1>} : memref<42x32xf32, #tpu.memory_space<vmem>>, vector<20x32xf32>
    %c0_60 = arith.constant 0 : index
    %c96_61 = arith.constant 96 : index
    %47 = vector.load %arg13[%c0_60, %c96_61] : memref<20x128xf32, #tpu.memory_space<vmem>>, vector<20x32xf32>
    tpu.vector_store %arg13[%c0_60, %c96_61], %46 {strides = array<i32>} : memref<20x128xf32, #tpu.memory_space<vmem>>, vector<20x32xf32>,
    %c0_62 = arith.constant 0 : index
    %c0_63 = arith.constant 0 : index
    %48 = vector.load %arg13[%c0_62, %c0_63] : memref<20x128xf32, #tpu.memory_space<vmem>>, vector<20x128xf32>
    %c0_64 = arith.constant 0 : index
    %c0_65 = arith.constant 0 : index
    %49 = vector.load %arg4[%c0_64, %c0_65] : memref<128x32xf32, #tpu.memory_space<vmem>>, vector<128x32xf32>
    %cst_66 = arith.constant dense<0.000000e+00> : vector<20x32xf32>
    %50 = tpu.matmul %48, %49, %cst_66 {dimension_numbers = #tpu.dot_dimension_numbers<[1], [0], [0], [1], [0, 0, 1, 1], [], []>} : vector<20x128xf32>, vector<128x32xf32>, vector<20x32xf32> -> vector<20x32xf32>
    %cst_67 = arith.constant 0.000000e+00 : f32
    %51 = vector.broadcast %cst_67 : f32 to vector<20x32xf32>
    %52 = arith.maximumf %50, %51 : vector<20x32xf32>
    %cst_68 = arith.constant 0.000000e+00 : f32
    %53 = vector.broadcast %cst_68 : f32 to vector<1x32xf32>
    %c0_69 = arith.constant 0 : index
    %c0_70 = arith.constant 0 : index
    %54 = vector.load %arg14[%c0_69, %c0_70] : memref<22x32xf32, #tpu.memory_space<vmem>>, vector<1x32xf32>
    tpu.vector_store %arg14[%c0_69, %c0_70], %53 {strides = array<i32>} : memref<22x32xf32, #tpu.memory_space<vmem>>, vector<1x32xf32>,
    %c1_71 = arith.constant 1 : index
    %c0_72 = arith.constant 0 : index
    %55 = vector.load %arg14[%c1_71, %c0_72] : memref<22x32xf32, #tpu.memory_space<vmem>>, vector<20x32xf32>
    tpu.vector_store %arg14[%c1_71, %c0_72], %52 {strides = array<i32>} : memref<22x32xf32, #tpu.memory_space<vmem>>, vector<20x32xf32>,
    %c21 = arith.constant 21 : index
    %c0_73 = arith.constant 0 : index
    %56 = vector.load %arg14[%c21, %c0_73] : memref<22x32xf32, #tpu.memory_space<vmem>>, vector<1x32xf32>
    tpu.vector_store %arg14[%c21, %c0_73], %53 {strides = array<i32>} : memref<22x32xf32, #tpu.memory_space<vmem>>, vector<1x32xf32>,
    %c0_74 = arith.constant 0 : index
    %c0_75 = arith.constant 0 : index
    %57 = tpu.strided_load %arg14[%c0_74, %c0_75] {strides = array<i32: 2, 1>} : memref<22x32xf32, #tpu.memory_space<vmem>>, vector<10x32xf32>
    %c0_76 = arith.constant 0 : index
    %c0_77 = arith.constant 0 : index
    %58 = vector.load %arg15[%c0_76, %c0_77] : memref<10x128xf32, #tpu.memory_space<vmem>>, vector<10x32xf32>
    tpu.vector_store %arg15[%c0_76, %c0_77], %57 {strides = array<i32>} : memref<10x128xf32, #tpu.memory_space<vmem>>, vector<10x32xf32>,
    %c1_78 = arith.constant 1 : index
    %c0_79 = arith.constant 0 : index
    %59 = tpu.strided_load %arg14[%c1_78, %c0_79] {strides = array<i32: 2, 1>} : memref<22x32xf32, #tpu.memory_space<vmem>>, vector<10x32xf32>
    %c0_80 = arith.constant 0 : index
    %c32_81 = arith.constant 32 : index
    %60 = vector.load %arg15[%c0_80, %c32_81] : memref<10x128xf32, #tpu.memory_space<vmem>>, vector<10x32xf32>
    tpu.vector_store %arg15[%c0_80, %c32_81], %59 {strides = array<i32>} : memref<10x128xf32, #tpu.memory_space<vmem>>, vector<10x32xf32>,
    %c2_82 = arith.constant 2 : index
    %c0_83 = arith.constant 0 : index
    %61 = tpu.strided_load %arg14[%c2_82, %c0_83] {strides = array<i32: 2, 1>} : memref<22x32xf32, #tpu.memory_space<vmem>>, vector<10x32xf32>
    %c0_84 = arith.constant 0 : index
    %c64_85 = arith.constant 64 : index
    %62 = vector.load %arg15[%c0_84, %c64_85] : memref<10x128xf32, #tpu.memory_space<vmem>>, vector<10x32xf32>
    tpu.vector_store %arg15[%c0_84, %c64_85], %61 {strides = array<i32>} : memref<10x128xf32, #tpu.memory_space<vmem>>, vector<10x32xf32>,
    %c3_86 = arith.constant 3 : index
    %c0_87 = arith.constant 0 : index
    %63 = tpu.strided_load %arg14[%c3_86, %c0_87] {strides = array<i32: 2, 1>} : memref<22x32xf32, #tpu.memory_space<vmem>>, vector<10x32xf32>
    %c0_88 = arith.constant 0 : index
    %c96_89 = arith.constant 96 : index
    %64 = vector.load %arg15[%c0_88, %c96_89] : memref<10x128xf32, #tpu.memory_space<vmem>>, vector<10x32xf32>
    tpu.vector_store %arg15[%c0_88, %c96_89], %63 {strides = array<i32>} : memref<10x128xf32, #tpu.memory_space<vmem>>, vector<10x32xf32>,
    %c0_90 = arith.constant 0 : index
    %c0_91 = arith.constant 0 : index
    %65 = vector.load %arg15[%c0_90, %c0_91] : memref<10x128xf32, #tpu.memory_space<vmem>>, vector<10x128xf32>
    %c0_92 = arith.constant 0 : index
    %c0_93 = arith.constant 0 : index
    %66 = vector.load %arg5[%c0_92, %c0_93] : memref<128x32xf32, #tpu.memory_space<vmem>>, vector<128x32xf32>
    %cst_94 = arith.constant dense<0.000000e+00> : vector<10x32xf32>
    %67 = tpu.matmul %65, %66, %cst_94 {dimension_numbers = #tpu.dot_dimension_numbers<[1], [0], [0], [1], [0, 0, 1, 1], [], []>} : vector<10x128xf32>, vector<128x32xf32>, vector<10x32xf32> -> vector<10x32xf32>
    %cst_95 = arith.constant 0.000000e+00 : f32
    %68 = vector.broadcast %cst_95 : f32 to vector<10x32xf32>
    %69 = arith.maximumf %67, %68 : vector<10x32xf32>
    %cst_96 = arith.constant 0.000000e+00 : f32
    %70 = vector.broadcast %cst_96 : f32 to vector<1x32xf32>
    %c0_97 = arith.constant 0 : index
    %c0_98 = arith.constant 0 : index
    %71 = vector.load %arg16[%c0_97, %c0_98] : memref<12x32xf32, #tpu.memory_space<vmem>>, vector<1x32xf32>
    tpu.vector_store %arg16[%c0_97, %c0_98], %70 {strides = array<i32>} : memref<12x32xf32, #tpu.memory_space<vmem>>, vector<1x32xf32>,
    %c1_99 = arith.constant 1 : index
    %c0_100 = arith.constant 0 : index
    %72 = vector.load %arg16[%c1_99, %c0_100] : memref<12x32xf32, #tpu.memory_space<vmem>>, vector<10x32xf32>
    tpu.vector_store %arg16[%c1_99, %c0_100], %69 {strides = array<i32>} : memref<12x32xf32, #tpu.memory_space<vmem>>, vector<10x32xf32>,
    %c11 = arith.constant 11 : index
    %c0_101 = arith.constant 0 : index
    %73 = vector.load %arg16[%c11, %c0_101] : memref<12x32xf32, #tpu.memory_space<vmem>>, vector<1x32xf32>
    tpu.vector_store %arg16[%c11, %c0_101], %70 {strides = array<i32>} : memref<12x32xf32, #tpu.memory_space<vmem>>, vector<1x32xf32>,
    %c0_102 = arith.constant 0 : index
    %c0_103 = arith.constant 0 : index
    %74 = tpu.strided_load %arg16[%c0_102, %c0_103] {strides = array<i32: 2, 1>} : memref<12x32xf32, #tpu.memory_space<vmem>>, vector<5x32xf32>
    %c0_104 = arith.constant 0 : index
    %c0_105 = arith.constant 0 : index
    %75 = vector.load %arg17[%c0_104, %c0_105] : memref<5x128xf32, #tpu.memory_space<vmem>>, vector<5x32xf32>
    tpu.vector_store %arg17[%c0_104, %c0_105], %74 {strides = array<i32>} : memref<5x128xf32, #tpu.memory_space<vmem>>, vector<5x32xf32>,
    %c1_106 = arith.constant 1 : index
    %c0_107 = arith.constant 0 : index
    %76 = tpu.strided_load %arg16[%c1_106, %c0_107] {strides = array<i32: 2, 1>} : memref<12x32xf32, #tpu.memory_space<vmem>>, vector<5x32xf32>
    %c0_108 = arith.constant 0 : index
    %c32_109 = arith.constant 32 : index
    %77 = vector.load %arg17[%c0_108, %c32_109] : memref<5x128xf32, #tpu.memory_space<vmem>>, vector<5x32xf32>
    tpu.vector_store %arg17[%c0_108, %c32_109], %76 {strides = array<i32>} : memref<5x128xf32, #tpu.memory_space<vmem>>, vector<5x32xf32>,
    %c2_110 = arith.constant 2 : index
    %c0_111 = arith.constant 0 : index
    %78 = tpu.strided_load %arg16[%c2_110, %c0_111] {strides = array<i32: 2, 1>} : memref<12x32xf32, #tpu.memory_space<vmem>>, vector<5x32xf32>
    %c0_112 = arith.constant 0 : index
    %c64_113 = arith.constant 64 : index
    %79 = vector.load %arg17[%c0_112, %c64_113] : memref<5x128xf32, #tpu.memory_space<vmem>>, vector<5x32xf32>
    tpu.vector_store %arg17[%c0_112, %c64_113], %78 {strides = array<i32>} : memref<5x128xf32, #tpu.memory_space<vmem>>, vector<5x32xf32>,
    %c3_114 = arith.constant 3 : index
    %c0_115 = arith.constant 0 : index
    %80 = tpu.strided_load %arg16[%c3_114, %c0_115] {strides = array<i32: 2, 1>} : memref<12x32xf32, #tpu.memory_space<vmem>>, vector<5x32xf32>
    %c0_116 = arith.constant 0 : index
    %c96_117 = arith.constant 96 : index
    %81 = vector.load %arg17[%c0_116, %c96_117] : memref<5x128xf32, #tpu.memory_space<vmem>>, vector<5x32xf32>
    tpu.vector_store %arg17[%c0_116, %c96_117], %80 {strides = array<i32>} : memref<5x128xf32, #tpu.memory_space<vmem>>, vector<5x32xf32>,
    %c0_118 = arith.constant 0 : index
    %c0_119 = arith.constant 0 : index
    %82 = vector.load %arg17[%c0_118, %c0_119] : memref<5x128xf32, #tpu.memory_space<vmem>>, vector<5x128xf32>
    %c0_120 = arith.constant 0 : index
    %c0_121 = arith.constant 0 : index
    %83 = vector.load %arg6[%c0_120, %c0_121] : memref<128x32xf32, #tpu.memory_space<vmem>>, vector<128x32xf32>
    %cst_122 = arith.constant dense<0.000000e+00> : vector<5x32xf32>
    %84 = tpu.matmul %82, %83, %cst_122 {dimension_numbers = #tpu.dot_dimension_numbers<[1], [0], [0], [1], [0, 0, 1, 1], [], []>} : vector<5x128xf32>, vector<128x32xf32>, vector<5x32xf32> -> vector<5x32xf32>
    %cst_123 = arith.constant 0.000000e+00 : f32
    %85 = vector.broadcast %cst_123 : f32 to vector<5x32xf32>
    %86 = arith.maximumf %84, %85 : vector<5x32xf32>
    %c0_124 = arith.constant 0 : index
    %c0_125 = arith.constant 0 : index
    %87 = vector.load %arg7[%c0_124, %c0_125] : memref<32x39xf32, #tpu.memory_space<vmem>>, vector<32x39xf32>
    %cst_126 = arith.constant dense<0.000000e+00> : vector<5x39xf32>
    %88 = tpu.matmul %86, %87, %cst_126 {dimension_numbers = #tpu.dot_dimension_numbers<[1], [0], [0], [1], [0, 0, 1, 1], [], []>} : vector<5x32xf32>, vector<32x39xf32>, vector<5x39xf32> -> vector<5x39xf32>
    %c0_127 = arith.constant 0 : index
    %c0_128 = arith.constant 0 : index
    %89 = vector.load %arg8[%c0_127, %c0_128] : memref<1x39xf32, #tpu.memory_space<vmem>>, vector<1x39xf32>
    %90 = vector.broadcast %89 : vector<1x39xf32> to vector<5x39xf32>
    %91 = arith.addf %88, %90 : vector<5x39xf32>
    %c0_129 = arith.constant 0 : index
    %c0_130 = arith.constant 0 : index
    %c0_131 = arith.constant 0 : index
    %92 = vector.load %arg9[%c0_129, %c0_130, %c0_131] : memref<1x5x39xf32, #tpu.memory_space<vmem>>, vector<1x5x39xf32>
    %93 = vector.shape_cast %92 : vector<1x5x39xf32> to vector<5x39xf32>
    %94 = vector.shape_cast %91 : vector<5x39xf32> to vector<1x5x39xf32>
    tpu.vector_store %arg9[%c0_129, %c0_130, %c0_131], %94 {strides = array<i32>} : memref<1x5x39xf32, #tpu.memory_space<vmem>>, vector<1x5x39xf32>,
    return
  }
  func.func @transform_0(%arg0: i32) -> (i32, i32, i32) {
    %c0_i32 = arith.constant 0 : i32
    %c0_i32_0 = arith.constant 0 : i32
    %c0_i32_1 = arith.constant 0 : i32
    return %arg0, %c0_i32, %c0_i32_0 : i32, i32, i32
  }
  func.func @transform_1(%arg0: i32) -> (i32, i32) {
    %c0_i32 = arith.constant 0 : i32
    %c0_i32_0 = arith.constant 0 : i32
    %c0_i32_1 = arith.constant 0 : i32
    return %c0_i32, %c0_i32_0 : i32, i32
  }
  func.func @transform_2(%arg0: i32) -> (i32, i32) {
    %c0_i32 = arith.constant 0 : i32
    %c0_i32_0 = arith.constant 0 : i32
    %c0_i32_1 = arith.constant 0 : i32
    return %c0_i32, %c0_i32_0 : i32, i32
  }
  func.func @transform_3(%arg0: i32) -> (i32, i32) {
    %c0_i32 = arith.constant 0 : i32
    %c0_i32_0 = arith.constant 0 : i32
    %c0_i32_1 = arith.constant 0 : i32
    return %c0_i32, %c0_i32_0 : i32, i32
  }
  func.func @transform_4(%arg0: i32) -> (i32, i32) {
    %c0_i32 = arith.constant 0 : i32
    %c0_i32_0 = arith.constant 0 : i32
    %c0_i32_1 = arith.constant 0 : i32
    return %c0_i32, %c0_i32_0 : i32, i32
  }
  func.func @transform_5(%arg0: i32) -> (i32, i32) {
    %c0_i32 = arith.constant 0 : i32
    %c0_i32_0 = arith.constant 0 : i32
    %c0_i32_1 = arith.constant 0 : i32
    return %c0_i32, %c0_i32_0 : i32, i32
  }
  func.func @transform_6(%arg0: i32) -> (i32, i32) {
    %c0_i32 = arith.constant 0 : i32
    %c0_i32_0 = arith.constant 0 : i32
    %c0_i32_1 = arith.constant 0 : i32
    return %c0_i32, %c0_i32_0 : i32, i32
  }
  func.func @transform_7(%arg0: i32) -> (i32, i32) {
    %c0_i32 = arith.constant 0 : i32
    %c0_i32_0 = arith.constant 0 : i32
    %c0_i32_1 = arith.constant 0 : i32
    return %c0_i32, %c0_i32_0 : i32, i32
  }
  func.func @transform_8(%arg0: i32) -> (i32, i32, i32) {
    %c0_i32 = arith.constant 0 : i32
    %c0_i32_0 = arith.constant 0 : i32
    %c0_i32_1 = arith.constant 0 : i32
    return %arg0, %c0_i32, %c0_i32_0 : i32, i32, i32
  }
}

</mosaic_0001>

<llo_original>
// kernel: ihc_cpc_forward.1
$region0: #{ihc_cpc_forward.1}
  #allocation0 [shape = 'u32[]', space=smem, size = 0x4, offset = 0x4, fixed_abs, tag = 'smem constant byte address 0x4 - core index']
  #allocation1 [shape = 'u32[144,128]{1,0:T(1,128)}', space=vmem, size = 0x12000, scoped, tag = 'internal scratch']
  #allocation2 [shape = 'f32[164,32]{1,0:T(8,128)}', space=vmem, size = 0x15000, scoped, tag = 'scratch operand']
  #allocation3 [shape = 'f32[40,256]{1,0:T(8,128)}', space=vmem, size = 0xa000, scoped, tag = 'scratch operand']
  #allocation4 [shape = 'f32[42,32]{1,0:T(8,128)}', space=vmem, size = 0x6000, scoped, tag = 'scratch operand']
  #allocation5 [shape = 'f32[20,128]{1,0:T(8,128)}', space=vmem, size = 0x3000, scoped, tag = 'scratch operand']
  #allocation6 [shape = 'f32[22,32]{1,0:T(8,128)}', space=vmem, size = 0x3000, scoped, tag = 'scratch operand']
  #allocation7 [shape = 'f32[10,128]{1,0:T(8,128)}', space=vmem, size = 0x2000, scoped, tag = 'scratch operand']
  #allocation8 [shape = 'f32[12,32]{1,0:T(8,128)}', space=vmem, size = 0x2000, scoped, tag = 'scratch operand']
  #allocation9 [shape = 'f32[5,128]{1,0:T(8,128)}', space=vmem, size = 0x1000, scoped, tag = 'scratch operand']
  %s0 = inlined_call_operand.vmem [shape: f32[2,161,400], index: 0, kind: input, shape index: {}]
  %s1 = inlined_call_operand.vmem [shape: f32[800,32], index: 1, kind: input, shape index: {}]
  %s2 = inlined_call_operand.vmem [shape: f32[256,32], index: 2, kind: input, shape index: {}]
  %s3 = inlined_call_operand.vmem [shape: f32[128,32], index: 3, kind: input, shape index: {}]
  %s4 = inlined_call_operand.vmem [shape: f32[128,32], index: 4, kind: input, shape index: {}]
  %s5 = inlined_call_operand.vmem [shape: f32[128,32], index: 5, kind: input, shape index: {}]
  %s6 = inlined_call_operand.vmem [shape: f32[32,39], index: 6, kind: input, shape index: {}]
  %s7 = inlined_call_operand.vmem [shape: f32[1,39], index: 7, kind: input, shape index: {}]
  %s8 = inlined_call_operand.vmem [shape: f32[2,5,39], index: 8, kind: output, shape index: {}]
  %s9 = sld [smem:[#allocation0]]
  $region65: #{ihc_cpc_forward.1} parent=0
    _
  %s11 = ssub.s32 1, %s9
  %s12 = scalar_select 0, %s11, %s9
  loop: start=0, step=1, limit=4
  $region2: #{ihc_cpc_forward.1} parent=0 // loop_pre_header
    _
  $region3: #{ihc_cpc_forward.1} parent=0 // loop_header
    %s14 = sphi 0, %s18
    %p15 = scmp.ge.s32.totalorder %s14, 4
    %s24 = sphi 0, %s26
    %s27 = sphi 0, %s24
    %s28 = sphi 0, %s27
    %s44 = sphi 0, %s28
    %s48 = sphi 0, %s48
    %s50 = sphi 0, %s48
    %s51 = sphi 0, %s50
    %s65 = sphi 0, %s51
    %s69 = sphi 0, %s69
    %s71 = sphi 0, %s69
    %s72 = sphi 0, %s71
    %s86 = sphi 0, %s72
    %s90 = sphi 0, %s90
    %s92 = sphi 0, %s90
    %s93 = sphi 0, %s92
    %s107 = sphi 0, %s93
    %s111 = sphi 0, %s111
    %s113 = sphi 0, %s111
    %s114 = sphi 0, %s113
    %s128 = sphi 0, %s114
    %s132 = sphi 0, %s132
    %s134 = sphi 0, %s132
    %s135 = sphi 0, %s134
    %s149 = sphi 0, %s135
    %s153 = sphi 0, %s153
    %s155 = sphi 0, %s153
    %s156 = sphi 0, %s155
    %s170 = sphi 0, %s156
    %s174 = sphi 0, %s174
    %s176 = sphi 0, %s174
    %s177 = sphi 0, %s176
    %s191 = sphi 0, %s177
    %s197 = sphi 0, %s199
    %s200 = sphi 0, %s197
    %s201 = sphi 0, %s200
    %s217 = sphi 0, %s201
  $region4: #{ihc_cpc_forward.1} parent=0 // loop_header_branch
    %17 = sbr.rel (%p15) target = $region8
  $region5: #{ihc_cpc_forward.1} parent=0 // loop_body
    %s19 = ssub.s32 %s14, 1
    %s20 = ssub.s32 %s14, 2
    %s21 = sadd.s32 %s14, 1
    %s22 = ssub.s32 %s14, %s21
    %p23 = scmp.eq.s32.totalorder %s22, 0
    %s25 = sadd.s32 %s24, 1
    %s26 = scalar_select %p23, %s24, %s25
    %p29 = pneg %p23
    %p30 = scmp.eq.s32.totalorder %s14, 1
    %p31 = por %p29, %p30
    %p32 = scmp.ne.s32.totalorder %s24, %s27
    %p33 = scmp.eq.s32.totalorder %s14, 0
    %p34 = por %p32, %p33
    %p35 = scmp.ne.s32.totalorder %s24, %s27
    %p36 = scmp.eq.s32.totalorder %s19, 1
    %p37 = por %p35, %p36
    %p38 = scmp.ne.s32.totalorder %s27, %s28
    %p39 = scmp.eq.s32.totalorder %s19, 0
    %p40 = por %p38, %p39
    %p41 = scmp.ne.s32.totalorder %s27, %s28
    %p42 = scmp.eq.s32.totalorder %s20, 1
    %p43 = por %p41, %p42
    %p45 = scmp.ne.s32.totalorder %s28, %s44
    %p46 = scmp.eq.s32.totalorder %s20, 0
    %p47 = por %p45, %p46
    %s49 = sadd.s32 %s48, 1
    %p52 = scmp.eq.s32.totalorder %s14, 1
    %p53 = scmp.ne.s32.totalorder %s48, %s50
    %p54 = scmp.eq.s32.totalorder %s14, 0
    %p55 = por %p53, %p54
    %p56 = scmp.ne.s32.totalorder %s48, %s50
    %p57 = scmp.eq.s32.totalorder %s19, 1
    %p58 = por %p56, %p57
    %p59 = scmp.ne.s32.totalorder %s50, %s51
    %p60 = scmp.eq.s32.totalorder %s19, 0
    %p61 = por %p59, %p60
    %p62 = scmp.ne.s32.totalorder %s50, %s51
    %p63 = scmp.eq.s32.totalorder %s20, 1
    %p64 = por %p62, %p63
    %p66 = scmp.ne.s32.totalorder %s51, %s65
    %p67 = scmp.eq.s32.totalorder %s20, 0
    %p68 = por %p66, %p67
    %s70 = sadd.s32 %s69, 1
    %p73 = scmp.eq.s32.totalorder %s14, 1
    %p74 = scmp.ne.s32.totalorder %s69, %s71
    %p75 = scmp.eq.s32.totalorder %s14, 0
    %p76 = por %p74, %p75
    %p77 = scmp.ne.s32.totalorder %s69, %s71
    %p78 = scmp.eq.s32.totalorder %s19, 1
    %p79 = por %p77, %p78
    %p80 = scmp.ne.s32.totalorder %s71, %s72
    %p81 = scmp.eq.s32.totalorder %s19, 0
    %p82 = por %p80, %p81
    %p83 = scmp.ne.s32.totalorder %s71, %s72
    %p84 = scmp.eq.s32.totalorder %s20, 1
    %p85 = por %p83, %p84
    %p87 = scmp.ne.s32.totalorder %s72, %s86
    %p88 = scmp.eq.s32.totalorder %s20, 0
    %p89 = por %p87, %p88
    %s91 = sadd.s32 %s90, 1
    %p94 = scmp.eq.s32.totalorder %s14, 1
    %p95 = scmp.ne.s32.totalorder %s90, %s92
    %p96 = scmp.eq.s32.totalorder %s14, 0
    %p97 = por %p95, %p96
    %p98 = scmp.ne.s32.totalorder %s90, %s92
    %p99 = scmp.eq.s32.totalorder %s19, 1
    %p100 = por %p98, %p99
    %p101 = scmp.ne.s32.totalorder %s92, %s93
    %p102 = scmp.eq.s32.totalorder %s19, 0
    %p103 = por %p101, %p102
    %p104 = scmp.ne.s32.totalorder %s92, %s93
    %p105 = scmp.eq.s32.totalorder %s20, 1
    %p106 = por %p104, %p105
    %p108 = scmp.ne.s32.totalorder %s93, %s107
    %p109 = scmp.eq.s32.totalorder %s20, 0
    %p110 = por %p108, %p109
    %s112 = sadd.s32 %s111, 1
    %p115 = scmp.eq.s32.totalorder %s14, 1
    %p116 = scmp.ne.s32.totalorder %s111, %s113
    %p117 = scmp.eq.s32.totalorder %s14, 0
    %p118 = por %p116, %p117
    %p119 = scmp.ne.s32.totalorder %s111, %s113
    %p120 = scmp.eq.s32.totalorder %s19, 1
    %p121 = por %p119, %p120
    %p122 = scmp.ne.s32.totalorder %s113, %s114
    %p123 = scmp.eq.s32.totalorder %s19, 0
    %p124 = por %p122, %p123
    %p125 = scmp.ne.s32.totalorder %s113, %s114
    %p126 = scmp.eq.s32.totalorder %s20, 1
    %p127 = por %p125, %p126
    %p129 = scmp.ne.s32.totalorder %s114, %s128
    %p130 = scmp.eq.s32.totalorder %s20, 0
    %p131 = por %p129, %p130
    %s133 = sadd.s32 %s132, 1
    %p136 = scmp.eq.s32.totalorder %s14, 1
    %p137 = scmp.ne.s32.totalorder %s132, %s134
    %p138 = scmp.eq.s32.totalorder %s14, 0
    %p139 = por %p137, %p138
    %p140 = scmp.ne.s32.totalorder %s132, %s134
    %p141 = scmp.eq.s32.totalorder %s19, 1
    %p142 = por %p140, %p141
    %p143 = scmp.ne.s32.totalorder %s134, %s135
    %p144 = scmp.eq.s32.totalorder %s19, 0
    %p145 = por %p143, %p144
    %p146 = scmp.ne.s32.totalorder %s134, %s135
    %p147 = scmp.eq.s32.totalorder %s20, 1
    %p148 = por %p146, %p147
    %p150 = scmp.ne.s32.totalorder %s135, %s149
    %p151 = scmp.eq.s32.totalorder %s20, 0
    %p152 = por %p150, %p151
    %s154 = sadd.s32 %s153, 1
    %p157 = scmp.eq.s32.totalorder %s14, 1
    %p158 = scmp.ne.s32.totalorder %s153, %s155
    %p159 = scmp.eq.s32.totalorder %s14, 0
    %p160 = por %p158, %p159
    %p161 = scmp.ne.s32.totalorder %s153, %s155
    %p162 = scmp.eq.s32.totalorder %s19, 1
    %p163 = por %p161, %p162
    %p164 = scmp.ne.s32.totalorder %s155, %s156
    %p165 = scmp.eq.s32.totalorder %s19, 0
    %p166 = por %p164, %p165
    %p167 = scmp.ne.s32.totalorder %s155, %s156
    %p168 = scmp.eq.s32.totalorder %s20, 1
    %p169 = por %p167, %p168
    %p171 = scmp.ne.s32.totalorder %s156, %s170
    %p172 = scmp.eq.s32.totalorder %s20, 0
    %p173 = por %p171, %p172
    %s175 = sadd.s32 %s174, 1
    %p178 = scmp.eq.s32.totalorder %s14, 1
    %p179 = scmp.ne.s32.totalorder %s174, %s176
    %p180 = scmp.eq.s32.totalorder %s14, 0
    %p181 = por %p179, %p180
    %p182 = scmp.ne.s32.totalorder %s174, %s176
    %p183 = scmp.eq.s32.totalorder %s19, 1
    %p184 = por %p182, %p183
    %p185 = scmp.ne.s32.totalorder %s176, %s177
    %p186 = scmp.eq.s32.totalorder %s19, 0
    %p187 = por %p185, %p186
    %p188 = scmp.ne.s32.totalorder %s176, %s177
    %p189 = scmp.eq.s32.totalorder %s20, 1
    %p190 = por %p188, %p189
    %p192 = scmp.ne.s32.totalorder %s177, %s191
    %p193 = scmp.eq.s32.totalorder %s20, 0
    %p194 = por %p192, %p193
    %s195 = ssub.s32 %s14, %s21
    %p196 = scmp.eq.s32.totalorder %s195, 0
    %s198 = sadd.s32 %s197, 1
    %s199 = scalar_select %p196, %s197, %s198
    %p202 = pneg %p196
    %p203 = scmp.eq.s32.totalorder %s14, 1
    %p204 = por %p202, %p203
    %p205 = scmp.ne.s32.totalorder %s197, %s200
    %p206 = scmp.eq.s32.totalorder %s14, 0
    %p207 = por %p205, %p206
    %p208 = scmp.ne.s32.totalorder %s197, %s200
    %p209 = scmp.eq.s32.totalorder %s19, 1
    %p210 = por %p208, %p209
    %p211 = scmp.ne.s32.totalorder %s200, %s201
    %p212 = scmp.eq.s32.totalorder %s19, 0
    %p213 = por %p211, %p212
    %p214 = scmp.ne.s32.totalorder %s200, %s201
    %p215 = scmp.eq.s32.totalorder %s20, 1
    %p216 = por %p214, %p215
    %p218 = scmp.ne.s32.totalorder %s201, %s217
    %p219 = scmp.eq.s32.totalorder %s20, 0
    %p220 = por %p218, %p219
    %p221 = scmp.le.s32.totalorder 1, %s14
    %p222 = scmp.lt.s32.totalorder %s14, 3
    %p223 = pnand %p221, %p222
    %p224 = pneg %p223
    // Predicated region
    $region9: #{ihc_cpc_forward.1} parent=5 // pred_check
      _
    $region10: #{ihc_cpc_forward.1} parent=5 // pred_check_branch
      %226 = sbr.rel (%p223) target = $region12
    $region11: #{ihc_cpc_forward.1} parent=5 // pred_region
      %s227 = ssub.s32 %s14, 1
      // Predicated region
      $region13: #{ihc_cpc_forward.1} parent=11 // pred_check
        %p228 = pneg %p61
      $region14: #{ihc_cpc_forward.1} parent=11 // pred_check_branch
        %230 = sbr.rel (%p228) target = $region16
      $region15: #{ihc_cpc_forward.1} parent=11 // pred_region
        _
      $region16: #{ihc_cpc_forward.1} parent=11 // pred_fallthru
        _
      // Predicated region
      $region17: #{ihc_cpc_forward.1} parent=11 // pred_check
        %p231 = pneg %p82
      $region18: #{ihc_cpc_forward.1} parent=11 // pred_check_branch
        %233 = sbr.rel (%p231) target = $region20
      $region19: #{ihc_cpc_forward.1} parent=11 // pred_region
        _
      $region20: #{ihc_cpc_forward.1} parent=11 // pred_fallthru
        _
      // Predicated region
      $region21: #{ihc_cpc_forward.1} parent=11 // pred_check
        %p234 = pneg %p103
      $region22: #{ihc_cpc_forward.1} parent=11 // pred_check_branch
        %236 = sbr.rel (%p234) target = $region24
      $region23: #{ihc_cpc_forward.1} parent=11 // pred_region
        _
      $region24: #{ihc_cpc_forward.1} parent=11 // pred_fallthru
        _
      // Predicated region
      $region25: #{ihc_cpc_forward.1} parent=11 // pred_check
        %p237 = pneg %p124
      $region26: #{ihc_cpc_forward.1} parent=11 // pred_check_branch
        %239 = sbr.rel (%p237) target = $region28
      $region27: #{ihc_cpc_forward.1} parent=11 // pred_region
        _
      $region28: #{ihc_cpc_forward.1} parent=11 // pred_fallthru
        _
      // Predicated region
      $region29: #{ihc_cpc_forward.1} parent=11 // pred_check
        %p240 = pneg %p145
      $region30: #{ihc_cpc_forward.1} parent=11 // pred_check_branch
        %242 = sbr.rel (%p240) target = $region32
      $region31: #{ihc_cpc_forward.1} parent=11 // pred_region
        _
      $region32: #{ihc_cpc_forward.1} parent=11 // pred_fallthru
        _
      // Predicated region
      $region33: #{ihc_cpc_forward.1} parent=11 // pred_check
        %p243 = pneg %p166
      $region34: #{ihc_cpc_forward.1} parent=11 // pred_check_branch
        %245 = sbr.rel (%p243) target = $region36
      $region35: #{ihc_cpc_forward.1} parent=11 // pred_region
        _
      $region36: #{ihc_cpc_forward.1} parent=11 // pred_fallthru
        _
      // Predicated region
      $region37: #{ihc_cpc_forward.1} parent=11 // pred_check
        %p246 = pneg %p187
      $region38: #{ihc_cpc_forward.1} parent=11 // pred_check_branch
        %248 = sbr.rel (%p246) target = $region40
      $region39: #{ihc_cpc_forward.1} parent=11 // pred_region
        _
      $region40: #{ihc_cpc_forward.1} parent=11 // pred_fallthru
        _
    $region12: #{ihc_cpc_forward.1} parent=5 // pred_fallthru
      _
    %p249 = scmp.lt.s32.totalorder %s14, 2
    // Predicated region
    $region41: #{ihc_cpc_forward.1} parent=5 // pred_check
      %p250 = pneg %p249
    $region42: #{ihc_cpc_forward.1} parent=5 // pred_check_branch
      %252 = sbr.rel (%p250) target = $region44
    $region43: #{ihc_cpc_forward.1} parent=5 // pred_region
      // Predicated region
      $region45: #{ihc_cpc_forward.1} parent=43 // pred_check
        %p253 = pneg %p34
      $region46: #{ihc_cpc_forward.1} parent=43 // pred_check_branch
        %255 = sbr.rel (%p253) target = $region48
      $region47: #{ihc_cpc_forward.1} parent=43 // pred_region
        %p256 = scmp.lt.s32.totalorder %s14, 1
        %s257 = scalar_select %p256, %s14, 1
        %s258 = smul.addr %s257, 84
        %s259 = smul.addr %s258, 8
        %s260 = scalar_lea.vmem %s0, %s259
      $region48: #{ihc_cpc_forward.1} parent=43 // pred_fallthru
        _
    $region44: #{ihc_cpc_forward.1} parent=5 // pred_fallthru
      _
    %p261 = scmp.le.s32.totalorder 1, %s14
    %p262 = scmp.lt.s32.totalorder %s14, 3
    %p263 = pnand %p261, %p262
    %p264 = pneg %p263
    // Predicated region
    $region49: #{ihc_cpc_forward.1} parent=5 // pred_check
      _
    $region50: #{ihc_cpc_forward.1} parent=5 // pred_check_branch
      %266 = sbr.rel (%p263) target = $region52
    $region51: #{ihc_cpc_forward.1} parent=5 // pred_region
      %s267 = ssub.s32 %s14, 1
      %p268 = scmp.lt.s32.totalorder %s19, 1
      %s269 = scalar_select %p268, %s19, 1
      %s270 = smul.addr %s269, 84
      %s271 = smul.addr %s270, 8
      %s272 = scalar_lea.vmem %s0, %s271
      %p273 = pneg %p40
      %p274 = pneg %p37
      %p275 = pneg %p61
      %p276 = pneg %p58
      %p277 = pneg %p82
      %p278 = pneg %p79
      %p279 = pneg %p103
      %p280 = pneg %p100
      %p281 = pneg %p124
      %p282 = pneg %p121
      %p283 = pneg %p145
      %p284 = pneg %p142
      %p285 = pneg %p166
      %p286 = pneg %p163
      %p287 = pneg %p187
      %p288 = pneg %p184
      %p289 = pneg %p213
      %p290 = pneg %p210
      %p291 = scmp.lt.s32.totalorder %s19, 1
      %s292 = scalar_select %p291, %s19, 1
      %s293 = smul.addr %s292, 8
      %s294 = scalar_lea.vmem %s8, %s293
      %p295 = scmp.lt.s32.totalorder %s19, 1
      %s296 = scalar_select %p295, %s19, 1
      %s297 = smul.addr %s296, 84
      %s298 = smul.addr %s297, 8
      %s299 = scalar_lea.vmem %s0, %s298
      %p300 = scmp.lt.s32.totalorder %s19, 1
      %s301 = scalar_select %p300, %s19, 1
      %s302 = smul.addr %s301, 8
      %s303 = scalar_lea.vmem %s8, %s302
      %v304 = vld [vmem:[%s299] sm:$0xff]
      %v305 = vld [vmem:[%s299 + $0x8] sm:$0xff]
      %v306 = vld [vmem:[%s299 + $0x10] sm:$0xff]
      %v307 = vld [vmem:[%s299 + $0x18] sm:$0xff]
      %v308 = vld [vmem:[%s299 + $0x20] sm:$0xff]
      %v309 = vld [vmem:[%s299 + $0x28] sm:$0xff]
      %v310 = vld [vmem:[%s299 + $0x30] sm:$0xff]
      %v311 = vld [vmem:[%s299 + $0x38] sm:$0xff]
      %v312 = vld [vmem:[%s299 + $0x40] sm:$0xff]
      %v313 = vld [vmem:[%s299 + $0x48] sm:$0xff]
      %v314 = vld [vmem:[%s299 + $0x50] sm:$0xff]
      %v315 = vld [vmem:[%s299 + $0x58] sm:$0xff]
      %v316 = vld [vmem:[%s299 + $0x60] sm:$0xff]
      %v317 = vld [vmem:[%s299 + $0x68] sm:$0xff]
      %v318 = vld [vmem:[%s299 + $0x70] sm:$0xff]
      %v319 = vld [vmem:[%s299 + $0x78] sm:$0xff]
      %v320 = vld [vmem:[%s299 + $0x80] sm:$0xff]
      %v321 = vld [vmem:[%s299 + $0x88] sm:$0xff]
      %v322 = vld [vmem:[%s299 + $0x90] sm:$0xff]
      %v323 = vld [vmem:[%s299 + $0x98] sm:$0xff]
      %v324 = vld [vmem:[%s299 + $0xa0] sm:$0xff]
      %v325 = vld [vmem:[%s299 + $0xa8] sm:$0xff]
      %v326 = vld [vmem:[%s299 + $0xb0] sm:$0xff]
      %v327 = vld [vmem:[%s299 + $0xb8] sm:$0xff]
      %v328 = vld [vmem:[%s299 + $0xc0] sm:$0xff]
      %v329 = vld [vmem:[%s299 + $0xc8] sm:$0xff]
      %v330 = vld [vmem:[%s299 + $0xd0] sm:$0xff]
      %v331 = vld [vmem:[%s299 + $0xd8] sm:$0xff]
      %v332 = vld [vmem:[%s299 + $0xe0] sm:$0xff]
      %v333 = vld [vmem:[%s299 + $0xe8] sm:$0xff]
      %v334 = vld [vmem:[%s299 + $0xf0] sm:$0xff]
      %v335 = vld [vmem:[%s299 + $0xf8] sm:$0xff]
      %v336 = vld [vmem:[%s299 + $0x100] sm:$0xff]
      %v337 = vld [vmem:[%s299 + $0x108] sm:$0xff]
      %v338 = vld [vmem:[%s299 + $0x110] sm:$0xff]
      %v339 = vld [vmem:[%s299 + $0x118] sm:$0xff]
      %v340 = vld [vmem:[%s299 + $0x120] sm:$0xff]
      %v341 = vld [vmem:[%s299 + $0x128] sm:$0xff]
      %v342 = vld [vmem:[%s299 + $0x130] sm:$0xff]
      %v343 = vld [vmem:[%s299 + $0x138] sm:$0xff]
      %v344 = vld [vmem:[%s299 + $0x140] sm:$0xff]
      %v345 = vld [vmem:[%s299 + $0x148] sm:$0xff]
      %v346 = vld [vmem:[%s299 + $0x150] sm:$0xff]
      %v347 = vld [vmem:[%s299 + $0x158] sm:$0xff]
      %v348 = vld [vmem:[%s299 + $0x160] sm:$0xff]
      %v349 = vld [vmem:[%s299 + $0x168] sm:$0xff]
      %v350 = vld [vmem:[%s299 + $0x170] sm:$0xff]
      %v351 = vld [vmem:[%s299 + $0x178] sm:$0xff]
      %v352 = vld [vmem:[%s299 + $0x180] sm:$0xff]
      %v353 = vld [vmem:[%s299 + $0x188] sm:$0xff]
      %v354 = vld [vmem:[%s299 + $0x190] sm:$0xff]
      %v355 = vld [vmem:[%s299 + $0x198] sm:$0xff]
      %v356 = vld [vmem:[%s299 + $0x1a0] sm:$0xff]
      %v357 = vld [vmem:[%s299 + $0x1a8] sm:$0xff]
      %v358 = vld [vmem:[%s299 + $0x1b0] sm:$0xff]
      %v359 = vld [vmem:[%s299 + $0x1b8] sm:$0xff]
      %v360 = vld [vmem:[%s299 + $0x1c0] sm:$0xff]
      %v361 = vld [vmem:[%s299 + $0x1c8] sm:$0xff]
      %v362 = vld [vmem:[%s299 + $0x1d0] sm:$0xff]
      %v363 = vld [vmem:[%s299 + $0x1d8] sm:$0xff]
      %v364 = vld [vmem:[%s299 + $0x1e0] sm:$0xff]
      %v365 = vld [vmem:[%s299 + $0x1e8] sm:$0xff]
      %v366 = vld [vmem:[%s299 + $0x1f0] sm:$0xff]
      %v367 = vld [vmem:[%s299 + $0x1f8] sm:$0xff]
      %v368 = vld [vmem:[%s299 + $0x200] sm:$0xff]
      %v369 = vld [vmem:[%s299 + $0x208] sm:$0xff]
      %v370 = vld [vmem:[%s299 + $0x210] sm:$0xff]
      %v371 = vld [vmem:[%s299 + $0x218] sm:$0xff]
      %v372 = vld [vmem:[%s299 + $0x220] sm:$0xff]
      %v373 = vld [vmem:[%s299 + $0x228] sm:$0xff]
      %v374 = vld [vmem:[%s299 + $0x230] sm:$0xff]
      %v375 = vld [vmem:[%s299 + $0x238] sm:$0xff]
      %v376 = vld [vmem:[%s299 + $0x240] sm:$0xff]
      %v377 = vld [vmem:[%s299 + $0x248] sm:$0xff]
      %v378 = vld [vmem:[%s299 + $0x250] sm:$0xff]
      %v379 = vld [vmem:[%s299 + $0x258] sm:$0xff]
      %v380 = vld [vmem:[%s299 + $0x260] sm:$0xff]
      %v381 = vld [vmem:[%s299 + $0x268] sm:$0xff]
      %v382 = vld [vmem:[%s299 + $0x270] sm:$0xff]
      %v383 = vld [vmem:[%s299 + $0x278] sm:$0xff]
      %v384 = vld [vmem:[%s299] sm:$0xfe]
      %v385 = vld [vmem:[%s299 + $0x8] sm:$0xfe]
      %v386 = vld [vmem:[%s299 + $0x10] sm:$0xfe]
      %v387 = vld [vmem:[%s299 + $0x18] sm:$0xfe]
      %v388 = vld [vmem:[%s299 + $0x280] sm:$0x1]
      %v389 = vld [vmem:[%s299 + $0x288] sm:$0x1]
      %v390 = vld [vmem:[%s299 + $0x290] sm:$0x1]
      %v391 = vld [vmem:[%s299 + $0x298] sm:$0x1]
      %v392 = vld [vmem:[%s1] sm:$0xff]
      %v393 = vld [vmem:[%s1 + $0x8] sm:$0xff]
      %v394 = vld [vmem:[%s1 + $0x10] sm:$0xff]
      %v395 = vld [vmem:[%s1 + $0x18] sm:$0xff]
      %v396 = vld [vmem:[%s1 + $0x20] sm:$0xff]
      %v397 = vld [vmem:[%s1 + $0x28] sm:$0xff]
      %v398 = vld [vmem:[%s1 + $0x30] sm:$0xff]
      %v399 = vld [vmem:[%s1 + $0x38] sm:$0xff]
      %v400 = vld [vmem:[%s1 + $0x40] sm:$0xff]
      %v401 = vld [vmem:[%s1 + $0x48] sm:$0xff]
      %v402 = vld [vmem:[%s1 + $0x50] sm:$0xff]
      %v403 = vld [vmem:[%s1 + $0x58] sm:$0xff]
      %v404 = vld [vmem:[%s1 + $0x60] sm:$0xff]
      %v405 = vld [vmem:[%s1 + $0x68] sm:$0xff]
      %v406 = vld [vmem:[%s1 + $0x70] sm:$0xff]
      %v407 = vld [vmem:[%s1 + $0x78] sm:$0xff]
      %v408 = vld [vmem:[%s1 + $0x80] sm:$0xff]
      %v409 = vld [vmem:[%s1 + $0x88] sm:$0xff]
      %v410 = vld [vmem:[%s1 + $0x90] sm:$0xff]
      %v411 = vld [vmem:[%s1 + $0x98] sm:$0xff]
      %v412 = vld [vmem:[%s1 + $0xa0] sm:$0xff]
      %v413 = vld [vmem:[%s1 + $0xa8] sm:$0xff]
      %v414 = vld [vmem:[%s1 + $0xb0] sm:$0xff]
      %v415 = vld [vmem:[%s1 + $0xb8] sm:$0xff]
      %v416 = vld [vmem:[%s1 + $0xc0] sm:$0xff]
      %v417 = vld [vmem:[%s1 + $0xc8] sm:$0xff]
      %v418 = vld [vmem:[%s1 + $0xd0] sm:$0xff]
      %v419 = vld [vmem:[%s1 + $0xd8] sm:$0xff]
      %v420 = vld [vmem:[%s1 + $0xe0] sm:$0xff]
      %v421 = vld [vmem:[%s1 + $0xe8] sm:$0xff]
      %v422 = vld [vmem:[%s1 + $0xf0] sm:$0xff]
      %v423 = vld [vmem:[%s1 + $0xf8] sm:$0xff]
      %v424 = vld [vmem:[%s1 + $0x100] sm:$0xff]
      %v425 = vld [vmem:[%s1 + $0x108] sm:$0xff]
      %v426 = vld [vmem:[%s1 + $0x110] sm:$0xff]
      %v427 = vld [vmem:[%s1 + $0x118] sm:$0xff]
      %v428 = vld [vmem:[%s1 + $0x120] sm:$0xff]
      %v429 = vld [vmem:[%s1 + $0x128] sm:$0xff]
      %v430 = vld [vmem:[%s1 + $0x130] sm:$0xff]
      %v431 = vld [vmem:[%s1 + $0x138] sm:$0xff]
      %v432 = vld [vmem:[%s1 + $0x140] sm:$0xff]
      %v433 = vld [vmem:[%s1 + $0x148] sm:$0xff]
      %v434 = vld [vmem:[%s1 + $0x150] sm:$0xff]
      %v435 = vld [vmem:[%s1 + $0x158] sm:$0xff]
      %v436 = vld [vmem:[%s1 + $0x160] sm:$0xff]
      %v437 = vld [vmem:[%s1 + $0x168] sm:$0xff]
      %v438 = vld [vmem:[%s1 + $0x170] sm:$0xff]
      %v439 = vld [vmem:[%s1 + $0x178] sm:$0xff]
      %v440 = vld [vmem:[%s1 + $0x180] sm:$0xff]
      %v441 = vld [vmem:[%s1 + $0x188] sm:$0xff]
      %v442 = vld [vmem:[%s1 + $0x190] sm:$0xff]
      %v443 = vld [vmem:[%s1 + $0x198] sm:$0xff]
      %v444 = vld [vmem:[%s1 + $0x1a0] sm:$0xff]
      %v445 = vld [vmem:[%s1 + $0x1a8] sm:$0xff]
      %v446 = vld [vmem:[%s1 + $0x1b0] sm:$0xff]
      %v447 = vld [vmem:[%s1 + $0x1b8] sm:$0xff]
      %v448 = vld [vmem:[%s1 + $0x1c0] sm:$0xff]
      %v449 = vld [vmem:[%s1 + $0x1c8] sm:$0xff]
      %v450 = vld [vmem:[%s1 + $0x1d0] sm:$0xff]
      %v451 = vld [vmem:[%s1 + $0x1d8] sm:$0xff]
      %v452 = vld [vmem:[%s1 + $0x1e0] sm:$0xff]
      %v453 = vld [vmem:[%s1 + $0x1e8] sm:$0xff]
      %v454 = vld [vmem:[%s1 + $0x1f0] sm:$0xff]
      %v455 = vld [vmem:[%s1 + $0x1f8] sm:$0xff]
      %v456 = vld [vmem:[%s1 + $0x200] sm:$0xff]
      %v457 = vld [vmem:[%s1 + $0x208] sm:$0xff]
      %v458 = vld [vmem:[%s1 + $0x210] sm:$0xff]
      %v459 = vld [vmem:[%s1 + $0x218] sm:$0xff]
      %v460 = vld [vmem:[%s1 + $0x220] sm:$0xff]
      %v461 = vld [vmem:[%s1 + $0x228] sm:$0xff]
      %v462 = vld [vmem:[%s1 + $0x230] sm:$0xff]
      %v463 = vld [vmem:[%s1 + $0x238] sm:$0xff]
      %v464 = vld [vmem:[%s1 + $0x240] sm:$0xff]
      %v465 = vld [vmem:[%s1 + $0x248] sm:$0xff]
      %v466 = vld [vmem:[%s1 + $0x250] sm:$0xff]
      %v467 = vld [vmem:[%s1 + $0x258] sm:$0xff]
      %v468 = vld [vmem:[%s1 + $0x260] sm:$0xff]
      %v469 = vld [vmem:[%s1 + $0x268] sm:$0xff]
      %v470 = vld [vmem:[%s1 + $0x270] sm:$0xff]
      %v471 = vld [vmem:[%s1 + $0x278] sm:$0xff]
      %v472 = vld [vmem:[%s1 + $0x280] sm:$0xff]
      %v473 = vld [vmem:[%s1 + $0x288] sm:$0xff]
      %v474 = vld [vmem:[%s1 + $0x290] sm:$0xff]
      %v475 = vld [vmem:[%s1 + $0x298] sm:$0xff]
      %v476 = vld [vmem:[%s1 + $0x2a0] sm:$0xff]
      %v477 = vld [vmem:[%s1 + $0x2a8] sm:$0xff]
      %v478 = vld [vmem:[%s1 + $0x2b0] sm:$0xff]
      %v479 = vld [vmem:[%s1 + $0x2b8] sm:$0xff]
      %v480 = vld [vmem:[%s1 + $0x2c0] sm:$0xff]
      %v481 = vld [vmem:[%s1 + $0x2c8] sm:$0xff]
      %v482 = vld [vmem:[%s1 + $0x2d0] sm:$0xff]
      %v483 = vld [vmem:[%s1 + $0x2d8] sm:$0xff]
      %v484 = vld [vmem:[%s1 + $0x2e0] sm:$0xff]
      %v485 = vld [vmem:[%s1 + $0x2e8] sm:$0xff]
      %v486 = vld [vmem:[%s1 + $0x2f0] sm:$0xff]
      %v487 = vld [vmem:[%s1 + $0x2f8] sm:$0xff]
      %v488 = vld [vmem:[%s1 + $0x300] sm:$0xff]
      %v489 = vld [vmem:[%s1 + $0x308] sm:$0xff]
      %v490 = vld [vmem:[%s1 + $0x310] sm:$0xff]
      %v491 = vld [vmem:[%s1 + $0x318] sm:$0xff]
      %vm576 = vcmask 1046528
      %v577 = vrot.slane %v384, 1
      %v578 = vrot.slane %v308, 1
      %v579 = vsel %vm576, %v577, %v578
      %v580 = vrot.slane %v385, 1
      %v581 = vrot.slane %v309, 1
      %v582 = vsel %vm576, %v580, %v581
      %v583 = vrot.slane %v386, 1
      %v584 = vrot.slane %v310, 1
      %v585 = vsel %vm576, %v583, %v584
      %v586 = vrot.slane %v387, 1
      %v587 = vrot.slane %v311, 1
      %v588 = vsel %vm576, %v586, %v587
      %v589 = vrot.slane %v312, 1
      %v590 = vsel %vm576, %v578, %v589
      %v591 = vrot.slane %v313, 1
      %v592 = vsel %vm576, %v581, %v591
      %v593 = vrot.slane %v314, 1
      %v594 = vsel %vm576, %v584, %v593
      %v595 = vrot.slane %v315, 1
      %v596 = vsel %vm576, %v587, %v595
      %v597 = vrot.slane %v316, 1
      %v598 = vsel %vm576, %v589, %v597
      %v599 = vrot.slane %v317, 1
      %v600 = vsel %vm576, %v591, %v599
      %v601 = vrot.slane %v318, 1
      %v602 = vsel %vm576, %v593, %v601
      %v603 = vrot.slane %v319, 1
      %v604 = vsel %vm576, %v595, %v603
      %v605 = vrot.slane %v320, 1
      %v606 = vsel %vm576, %v597, %v605
      %v607 = vrot.slane %v321, 1
      %v608 = vsel %vm576, %v599, %v607
      %v609 = vrot.slane %v322, 1
      %v610 = vsel %vm576, %v601, %v609
      %v611 = vrot.slane %v323, 1
      %v612 = vsel %vm576, %v603, %v611
      %v613 = vrot.slane %v324, 1
      %v614 = vsel %vm576, %v605, %v613
      %v615 = vrot.slane %v325, 1
      %v616 = vsel %vm576, %v607, %v615
      %v617 = vrot.slane %v326, 1
      %v618 = vsel %vm576, %v609, %v617
      %v619 = vrot.slane %v327, 1
      %v620 = vsel %vm576, %v611, %v619
      %v621 = vrot.slane %v328, 1
      %v622 = vsel %vm576, %v613, %v621
      %v623 = vrot.slane %v329, 1
      %v624 = vsel %vm576, %v615, %v623
      %v625 = vrot.slane %v330, 1
      %v626 = vsel %vm576, %v617, %v625
      %v627 = vrot.slane %v331, 1
      %v628 = vsel %vm576, %v619, %v627
      %v629 = vrot.slane %v332, 1
      %v630 = vsel %vm576, %v621, %v629
      %v631 = vrot.slane %v333, 1
      %v632 = vsel %vm576, %v623, %v631
      %v633 = vrot.slane %v334, 1
      %v634 = vsel %vm576, %v625, %v633
      %v635 = vrot.slane %v335, 1
      %v636 = vsel %vm576, %v627, %v635
      %v637 = vrot.slane %v336, 1
      %v638 = vsel %vm576, %v629, %v637
      %v639 = vrot.slane %v337, 1
      %v640 = vsel %vm576, %v631, %v639
      %v641 = vrot.slane %v338, 1
      %v642 = vsel %vm576, %v633, %v641
      %v643 = vrot.slane %v339, 1
      %v644 = vsel %vm576, %v635, %v643
      %v645 = vrot.slane %v340, 1
      %v646 = vsel %vm576, %v637, %v645
      %v647 = vrot.slane %v341, 1
      %v648 = vsel %vm576, %v639, %v647
      %v649 = vrot.slane %v342, 1
      %v650 = vsel %vm576, %v641, %v649
      %v651 = vrot.slane %v343, 1
      %v652 = vsel %vm576, %v643, %v651
      %v653 = vrot.slane %v344, 1
      %v654 = vsel %vm576, %v645, %v653
      %v655 = vrot.slane %v345, 1
      %v656 = vsel %vm576, %v647, %v655
      %v657 = vrot.slane %v346, 1
      %v658 = vsel %vm576, %v649, %v657
      %v659 = vrot.slane %v347, 1
      %v660 = vsel %vm576, %v651, %v659
      %v661 = vrot.slane %v348, 1
      %v662 = vsel %vm576, %v653, %v661
      %v663 = vrot.slane %v349, 1
      %v664 = vsel %vm576, %v655, %v663
      %v665 = vrot.slane %v350, 1
      %v666 = vsel %vm576, %v657, %v665
      %v667 = vrot.slane %v351, 1
      %v668 = vsel %vm576, %v659, %v667
      %v669 = vrot.slane %v352, 1
      %v670 = vsel %vm576, %v661, %v669
      %v671 = vrot.slane %v353, 1
      %v672 = vsel %vm576, %v663, %v671
      %v673 = vrot.slane %v354, 1
      %v674 = vsel %vm576, %v665, %v673
      %v675 = vrot.slane %v355, 1
      %v676 = vsel %vm576, %v667, %v675
      %v677 = vrot.slane %v356, 1
      %v678 = vsel %vm576, %v669, %v677
      %v679 = vrot.slane %v357, 1
      %v680 = vsel %vm576, %v671, %v679
      %v681 = vrot.slane %v358, 1
      %v682 = vsel %vm576, %v673, %v681
      %v683 = vrot.slane %v359, 1
      %v684 = vsel %vm576, %v675, %v683
      %v685 = vrot.slane %v360, 1
      %v686 = vsel %vm576, %v677, %v685
      %v687 = vrot.slane %v361, 1
      %v688 = vsel %vm576, %v679, %v687
      %v689 = vrot.slane %v362, 1
      %v690 = vsel %vm576, %v681, %v689
      %v691 = vrot.slane %v363, 1
      %v692 = vsel %vm576, %v683, %v691
      %v693 = vrot.slane %v364, 1
      %v694 = vsel %vm576, %v685, %v693
      %v695 = vrot.slane %v365, 1
      %v696 = vsel %vm576, %v687, %v695
      %v697 = vrot.slane %v366, 1
      %v698 = vsel %vm576, %v689, %v697
      %v699 = vrot.slane %v367, 1
      %v700 = vsel %vm576, %v691, %v699
      %v701 = vrot.slane %v368, 1
      %v702 = vsel %vm576, %v693, %v701
      %v703 = vrot.slane %v369, 1
      %v704 = vsel %vm576, %v695, %v703
      %v705 = vrot.slane %v370, 1
      %v706 = vsel %vm576, %v697, %v705
      %v707 = vrot.slane %v371, 1
      %v708 = vsel %vm576, %v699, %v707
      %v709 = vrot.slane %v372, 1
      %v710 = vsel %vm576, %v701, %v709
      %v711 = vrot.slane %v373, 1
      %v712 = vsel %vm576, %v703, %v711
      %v713 = vrot.slane %v374, 1
      %v714 = vsel %vm576, %v705, %v713
      %v715 = vrot.slane %v375, 1
      %v716 = vsel %vm576, %v707, %v715
      %v717 = vrot.slane %v376, 1
      %v718 = vsel %vm576, %v709, %v717
      %v719 = vrot.slane %v377, 1
      %v720 = vsel %vm576, %v711, %v719
      %v721 = vrot.slane %v378, 1
      %v722 = vsel %vm576, %v713, %v721
      %v723 = vrot.slane %v379, 1
      %v724 = vsel %vm576, %v715, %v723
      %v725 = vrot.slane %v380, 1
      %v726 = vsel %vm576, %v717, %v725
      %v727 = vrot.slane %v381, 1
      %v728 = vsel %vm576, %v719, %v727
      %v729 = vrot.slane %v382, 1
      %v730 = vsel %vm576, %v721, %v729
      %v731 = vrot.slane %v383, 1
      %v732 = vsel %vm576, %v723, %v731
      %v733 = vrot.slane %v388, 1
      %v734 = vsel %vm576, %v725, %v733
      %v735 = vrot.slane %v389, 1
      %v736 = vsel %vm576, %v727, %v735
      %v737 = vrot.slane %v390, 1
      %v738 = vsel %vm576, %v729, %v737
      %v739 = vrot.slane %v391, 1
      %v740 = vsel %vm576, %v731, %v739
      %vm801 = vcmask 130048
      %v802 = vsel %vm801, %v588, 0
      %v804 = vsel %vm801, %v596, 0
      %v806 = vsel %vm801, %v604, 0
      %v808 = vsel %vm801, %v612, 0
      %v810 = vsel %vm801, %v620, 0
      %v812 = vsel %vm801, %v628, 0
      %v814 = vsel %vm801, %v636, 0
      %v816 = vsel %vm801, %v644, 0
      %v818 = vsel %vm801, %v652, 0
      %v820 = vsel %vm801, %v660, 0
      %v822 = vsel %vm801, %v668, 0
      %v824 = vsel %vm801, %v676, 0
      %v826 = vsel %vm801, %v684, 0
      %v828 = vsel %vm801, %v692, 0
      %v830 = vsel %vm801, %v700, 0
      %v832 = vsel %vm801, %v708, 0
      %v834 = vsel %vm801, %v716, 0
      %v836 = vsel %vm801, %v724, 0
      %v838 = vsel %vm801, %v732, 0
      %v840 = vsel %vm801, %v740, 0
      %842 = vmatprep.subr.mxu0 0.0
      %843 = vmatpush1.msra.mxu0 %v457
      %844 = vmatprep.subr.mxu0 0.0
      %845 = vmatpush1.msra.mxu0 %v456
      %846 = vmatprep.subr.mxu0 0.0
      %847 = vmatpush1.msra.mxu0 %v455
      %848 = vmatprep.subr.mxu0 0.0
      %849 = vmatpush1.msra.mxu0 %v454
      %850 = vmatprep.subr.mxu0 0.0
      %851 = vmatpush1.msra.mxu0 %v453
      %852 = vmatprep.subr.mxu0 0.0
      %853 = vmatpush1.msra.mxu0 %v452
      %854 = vmatprep.subr.mxu0 0.0
      %855 = vmatpush1.msra.mxu0 %v451
      %856 = vmatprep.subr.mxu0 0.0
      %857 = vmatpush1.msra.mxu0 %v450
      %858 = vmatprep.subr.mxu0 0.0
      %859 = vmatpush1.msra.mxu0 %v449
      %860 = vmatprep.subr.mxu0 0.0
      %861 = vmatpush1.msra.mxu0 %v448
      %862 = vmatprep.subr.mxu0 0.0
      %863 = vmatpush1.msra.mxu0 %v447
      %864 = vmatprep.subr.mxu0 0.0
      %865 = vmatpush1.msra.mxu0 %v446
      %866 = vmatprep.subr.mxu0 0.0
      %867 = vmatpush1.msra.mxu0 %v445
      %868 = vmatprep.subr.mxu0 0.0
      %869 = vmatpush1.msra.mxu0 %v444
      %870 = vmatprep.subr.mxu0 0.0
      %871 = vmatpush1.msra.mxu0 %v443
      %872 = vmatprep.subr.mxu0 0.0
      %873 = vmatpush1.msra.mxu0 %v442
      %874 = vmatprep.subr.mxu0 0.0
      %875 = vmatpush2.msra.mxu0 %v473
      %876 = vmatprep.subr.mxu0 0.0
      %877 = vmatpush2.msra.mxu0 %v472
      %878 = vmatprep.subr.mxu0 0.0
      %879 = vmatpush2.msra.mxu0 %v471
      %880 = vmatprep.subr.mxu0 0.0
      %881 = vmatpush2.msra.mxu0 %v470
      %882 = vmatprep.subr.mxu0 0.0
      %883 = vmatpush2.msra.mxu0 %v469
      %884 = vmatprep.subr.mxu0 0.0
      %885 = vmatpush2.msra.mxu0 %v468
      %886 = vmatprep.subr.mxu0 0.0
      %887 = vmatpush2.msra.mxu0 %v467
      %888 = vmatprep.subr.mxu0 0.0
      %889 = vmatpush2.msra.mxu0 %v466
      %890 = vmatprep.subr.mxu0 0.0
      %891 = vmatpush2.msra.mxu0 %v465
      %892 = vmatprep.subr.mxu0 0.0
      %893 = vmatpush2.msra.mxu0 %v464
      %894 = vmatprep.subr.mxu0 0.0
      %895 = vmatpush2.msra.mxu0 %v463
      %896 = vmatprep.subr.mxu0 0.0
      %897 = vmatpush2.msra.mxu0 %v462
      %898 = vmatprep.subr.mxu0 0.0
      %899 = vmatpush2.msra.mxu0 %v461
      %900 = vmatprep.subr.mxu0 0.0
      %901 = vmatpush2.msra.mxu0 %v460
      %902 = vmatprep.subr.mxu0 0.0
      %903 = vmatpush2.msra.mxu0 %v459
      %904 = vmatprep.subr.mxu0 0.0
      %905 = vmatpush2.msra.mxu0 %v458
      %906 = vmatprep.mubr.f32.mxu0 %v582
      %907 = vmatmul.mubr.f32.gmra.mxu0 %v579
      %v908 = vpop.f32.mrf.mxu0
      %v909 = vadd.f32 0.0, %v908
      %v910 = vpop.f32.mrf.mxu0
      %911 = vmatprep.mubr.f32.mxu0 %v592
      %912 = vmatmul.mubr.f32.gmra.mxu0 %v590
      %v913 = vpop.f32.mrf.mxu0
      %v914 = vadd.f32 0.0, %v913
      %v915 = vpop.f32.mrf.mxu0
      %916 = vmatprep.mubr.f32.mxu0 %v600
      %917 = vmatmul.mubr.f32.gmra.mxu0 %v598
      %v918 = vpop.f32.mrf.mxu0
      %v919 = vadd.f32 0.0, %v918
      %v920 = vpop.f32.mrf.mxu0
      %921 = vmatprep.mubr.f32.mxu0 %v608
      %922 = vmatmul.mubr.f32.gmra.mxu0 %v606
      %v923 = vpop.f32.mrf.mxu0
      %v924 = vadd.f32 0.0, %v923
      %v925 = vpop.f32.mrf.mxu0
      %926 = vmatprep.mubr.f32.mxu0 %v616
      %927 = vmatmul.mubr.f32.gmra.mxu0 %v614
      %v928 = vpop.f32.mrf.mxu0
      %v929 = vadd.f32 0.0, %v928
      %v930 = vpop.f32.mrf.mxu0
      %931 = vmatprep.mubr.f32.mxu0 %v624
      %932 = vmatmul.mubr.f32.gmra.mxu0 %v622
      %v933 = vpop.f32.mrf.mxu0
      %v934 = vadd.f32 0.0, %v933
      %v935 = vpop.f32.mrf.mxu0
      %936 = vmatprep.mubr.f32.mxu0 %v632
      %937 = vmatmul.mubr.f32.gmra.mxu0 %v630
      %v938 = vpop.f32.mrf.mxu0
      %v939 = vadd.f32 0.0, %v938
      %v940 = vpop.f32.mrf.mxu0
      %941 = vmatprep.mubr.f32.mxu0 %v640
      %942 = vmatmul.mubr.f32.gmra.mxu0 %v638
      %v943 = vpop.f32.mrf.mxu0
      %v944 = vadd.f32 0.0, %v943
      %v945 = vpop.f32.mrf.mxu0
      %946 = vmatprep.mubr.f32.mxu0 %v648
      %947 = vmatmul.mubr.f32.gmra.mxu0 %v646
      %v948 = vpop.f32.mrf.mxu0
      %v949 = vadd.f32 0.0, %v948
      %v950 = vpop.f32.mrf.mxu0
      %951 = vmatprep.mubr.f32.mxu0 %v656
      %952 = vmatmul.mubr.f32.gmra.mxu0 %v654
      %v953 = vpop.f32.mrf.mxu0
      %v954 = vadd.f32 0.0, %v953
      %v955 = vpop.f32.mrf.mxu0
      %956 = vmatprep.mubr.f32.mxu0 %v664
      %957 = vmatmul.mubr.f32.gmra.mxu0 %v662
      %v958 = vpop.f32.mrf.mxu0
      %v959 = vadd.f32 0.0, %v958
      %v960 = vpop.f32.mrf.mxu0
      %961 = vmatprep.mubr.f32.mxu0 %v672
      %962 = vmatmul.mubr.f32.gmra.mxu0 %v670
      %v963 = vpop.f32.mrf.mxu0
      %v964 = vadd.f32 0.0, %v963
      %v965 = vpop.f32.mrf.mxu0
      %966 = vmatprep.mubr.f32.mxu0 %v680
      %967 = vmatmul.mubr.f32.gmra.mxu0 %v678
      %v968 = vpop.f32.mrf.mxu0
      %v969 = vadd.f32 0.0, %v968
      %v970 = vpop.f32.mrf.mxu0
      %971 = vmatprep.mubr.f32.mxu0 %v688
      %972 = vmatmul.mubr.f32.gmra.mxu0 %v686
      %v973 = vpop.f32.mrf.mxu0
      %v974 = vadd.f32 0.0, %v973
      %v975 = vpop.f32.mrf.mxu0
      %976 = vmatprep.mubr.f32.mxu0 %v696
      %977 = vmatmul.mubr.f32.gmra.mxu0 %v694
      %v978 = vpop.f32.mrf.mxu0
      %v979 = vadd.f32 0.0, %v978
      %v980 = vpop.f32.mrf.mxu0
      %981 = vmatprep.mubr.f32.mxu0 %v704
      %982 = vmatmul.mubr.f32.gmra.mxu0 %v702
      %v983 = vpop.f32.mrf.mxu0
      %v984 = vadd.f32 0.0, %v983
      %v985 = vpop.f32.mrf.mxu0
      %986 = vmatprep.mubr.f32.mxu0 %v712
      %987 = vmatmul.mubr.f32.gmra.mxu0 %v710
      %v988 = vpop.f32.mrf.mxu0
      %v989 = vadd.f32 0.0, %v988
      %v990 = vpop.f32.mrf.mxu0
      %991 = vmatprep.mubr.f32.mxu0 %v720
      %992 = vmatmul.mubr.f32.gmra.mxu0 %v718
      %v993 = vpop.f32.mrf.mxu0
      %v994 = vadd.f32 0.0, %v993
      %v995 = vpop.f32.mrf.mxu0
      %996 = vmatprep.mubr.f32.mxu0 %v728
      %997 = vmatmul.mubr.f32.gmra.mxu0 %v726
      %v998 = vpop.f32.mrf.mxu0
      %v999 = vadd.f32 0.0, %v998
      %v1000 = vpop.f32.mrf.mxu0
      %1001 = vmatprep.mubr.f32.mxu0 %v736
      %1002 = vmatmul.mubr.f32.gmra.mxu0 %v734
      %v1003 = vpop.f32.mrf.mxu0
      %v1004 = vadd.f32 0.0, %v1003
      %v1005 = vpop.f32.mrf.mxu0
      %1006 = vdwg.mxu0
      %1007 = vmatprep.subr.mxu0 0.0
      %1008 = vmatpush1.msra.mxu0 %v489
      %1009 = vmatprep.subr.mxu0 0.0
      %1010 = vmatpush1.msra.mxu0 %v488
      %1011 = vmatprep.subr.mxu0 0.0
      %1012 = vmatpush1.msra.mxu0 %v487
      %1013 = vmatprep.subr.mxu0 0.0
      %1014 = vmatpush1.msra.mxu0 %v486
      %1015 = vmatprep.subr.mxu0 0.0
      %1016 = vmatpush1.msra.mxu0 %v485
      %1017 = vmatprep.subr.mxu0 0.0
      %1018 = vmatpush1.msra.mxu0 %v484
      %1019 = vmatprep.subr.mxu0 0.0
      %1020 = vmatpush1.msra.mxu0 %v483
      %1021 = vmatprep.subr.mxu0 0.0
      %1022 = vmatpush1.msra.mxu0 %v482
      %1023 = vmatprep.subr.mxu0 0.0
      %1024 = vmatpush1.msra.mxu0 %v481
      %1025 = vmatprep.subr.mxu0 0.0
      %1026 = vmatpush1.msra.mxu0 %v480
      %1027 = vmatprep.subr.mxu0 0.0
      %1028 = vmatpush1.msra.mxu0 %v479
      %1029 = vmatprep.subr.mxu0 0.0
      %1030 = vmatpush1.msra.mxu0 %v478
      %1031 = vmatprep.subr.mxu0 0.0
      %1032 = vmatpush1.msra.mxu0 %v477
      %1033 = vmatprep.subr.mxu0 0.0
      %1034 = vmatpush1.msra.mxu0 %v476
      %1035 = vmatprep.subr.mxu0 0.0
      %1036 = vmatpush1.msra.mxu0 %v475
      %1037 = vmatprep.subr.mxu0 0.0
      %1038 = vmatpush1.msra.mxu0 %v474
      %1039 = vmatprep.subr.mxu0 0.0
      %1040 = vmatpush2.msra.mxu0 0.0
      %1041 = vmatprep.subr.mxu0 0.0
      %1042 = vmatpush2.msra.mxu0 0.0
      %1043 = vmatprep.subr.mxu0 0.0
      %1044 = vmatpush2.msra.mxu0 0.0
      %1045 = vmatprep.subr.mxu0 0.0
      %1046 = vmatpush2.msra.mxu0 0.0
      %1047 = vmatprep.subr.mxu0 0.0
      %1048 = vmatpush2.msra.mxu0 0.0
      %1049 = vmatprep.subr.mxu0 0.0
      %1050 = vmatpush2.msra.mxu0 0.0
      %1051 = vmatprep.subr.mxu0 0.0
      %1052 = vmatpush2.msra.mxu0 0.0
      %1053 = vmatprep.subr.mxu0 0.0
      %1054 = vmatpush2.msra.mxu0 0.0
      %1055 = vmatprep.subr.mxu0 0.0
      %1056 = vmatpush2.msra.mxu0 0.0
      %1057 = vmatprep.subr.mxu0 0.0
      %1058 = vmatpush2.msra.mxu0 0.0
      %1059 = vmatprep.subr.mxu0 0.0
      %1060 = vmatpush2.msra.mxu0 0.0
      %1061 = vmatprep.subr.mxu0 0.0
      %1062 = vmatpush2.msra.mxu0 0.0
      %1063 = vmatprep.subr.mxu0 0.0
      %1064 = vmatpush2.msra.mxu0 0.0
      %1065 = vmatprep.subr.mxu0 0.0
      %1066 = vmatpush2.msra.mxu0 0.0
      %1067 = vmatprep.subr.mxu0 0.0
      %1068 = vmatpush2.msra.mxu0 %v491
      %1069 = vmatprep.subr.mxu0 0.0
      %1070 = vmatpush2.msra.mxu0 %v490
      %1071 = vmatprep.mubr.f32.mxu0 %v802
      %1072 = vmatmul.mubr.f32.gmra.mxu0 %v585
      %v1073 = vpop.f32.mrf.mxu0
      %v1074 = vadd.f32 %v909, %v1073
      %v1075 = vpop.f32.mrf.mxu0
      %1076 = vmatprep.mubr.f32.mxu0 %v804
      %1077 = vmatmul.mubr.f32.gmra.mxu0 %v594
      %v1078 = vpop.f32.mrf.mxu0
      %v1079 = vadd.f32 %v914, %v1078
      %v1080 = vpop.f32.mrf.mxu0
      %1081 = vmatprep.mubr.f32.mxu0 %v806
      %1082 = vmatmul.mubr.f32.gmra.mxu0 %v602
      %v1083 = vpop.f32.mrf.mxu0
      %v1084 = vadd.f32 %v919, %v1083
      %v1085 = vpop.f32.mrf.mxu0
      %1086 = vmatprep.mubr.f32.mxu0 %v808
      %1087 = vmatmul.mubr.f32.gmra.mxu0 %v610
      %v1088 = vpop.f32.mrf.mxu0
      %v1089 = vadd.f32 %v924, %v1088
      %v1090 = vpop.f32.mrf.mxu0
      %1091 = vmatprep.mubr.f32.mxu0 %v810
      %1092 = vmatmul.mubr.f32.gmra.mxu0 %v618
      %v1093 = vpop.f32.mrf.mxu0
      %v1094 = vadd.f32 %v929, %v1093
      %v1095 = vpop.f32.mrf.mxu0
      %1096 = vmatprep.mubr.f32.mxu0 %v812
      %1097 = vmatmul.mubr.f32.gmra.mxu0 %v626
      %v1098 = vpop.f32.mrf.mxu0
      %v1099 = vadd.f32 %v934, %v1098
      %v1100 = vpop.f32.mrf.mxu0
      %1101 = vmatprep.mubr.f32.mxu0 %v814
      %1102 = vmatmul.mubr.f32.gmra.mxu0 %v634
      %v1103 = vpop.f32.mrf.mxu0
      %v1104 = vadd.f32 %v939, %v1103
      %v1105 = vpop.f32.mrf.mxu0
      %1106 = vmatprep.mubr.f32.mxu0 %v816
      %1107 = vmatmul.mubr.f32.gmra.mxu0 %v642
      %v1108 = vpop.f32.mrf.mxu0
      %v1109 = vadd.f32 %v944, %v1108
      %v1110 = vpop.f32.mrf.mxu0
      %1111 = vmatprep.mubr.f32.mxu0 %v818
      %1112 = vmatmul.mubr.f32.gmra.mxu0 %v650
      %v1113 = vpop.f32.mrf.mxu0
      %v1114 = vadd.f32 %v949, %v1113
      %v1115 = vpop.f32.mrf.mxu0
      %1116 = vmatprep.mubr.f32.mxu0 %v820
      %1117 = vmatmul.mubr.f32.gmra.mxu0 %v658
      %v1118 = vpop.f32.mrf.mxu0
      %v1119 = vadd.f32 %v954, %v1118
      %v1120 = vpop.f32.mrf.mxu0
      %1121 = vmatprep.mubr.f32.mxu0 %v822
      %1122 = vmatmul.mubr.f32.gmra.mxu0 %v666
      %v1123 = vpop.f32.mrf.mxu0
      %v1124 = vadd.f32 %v959, %v1123
      %v1125 = vpop.f32.mrf.mxu0
      %1126 = vmatprep.mubr.f32.mxu0 %v824
      %1127 = vmatmul.mubr.f32.gmra.mxu0 %v674
      %v1128 = vpop.f32.mrf.mxu0
      %v1129 = vadd.f32 %v964, %v1128
      %v1130 = vpop.f32.mrf.mxu0
      %1131 = vmatprep.mubr.f32.mxu0 %v826
      %1132 = vmatmul.mubr.f32.gmra.mxu0 %v682
      %v1133 = vpop.f32.mrf.mxu0
      %v1134 = vadd.f32 %v969, %v1133
      %v1135 = vpop.f32.mrf.mxu0
      %1136 = vmatprep.mubr.f32.mxu0 %v828
      %1137 = vmatmul.mubr.f32.gmra.mxu0 %v690
      %v1138 = vpop.f32.mrf.mxu0
      %v1139 = vadd.f32 %v974, %v1138
      %v1140 = vpop.f32.mrf.mxu0
      %1141 = vmatprep.mubr.f32.mxu0 %v830
      %1142 = vmatmul.mubr.f32.gmra.mxu0 %v698
      %v1143 = vpop.f32.mrf.mxu0
      %v1144 = vadd.f32 %v979, %v1143
      %v1145 = vpop.f32.mrf.mxu0
      %1146 = vmatprep.mubr.f32.mxu0 %v832
      %1147 = vmatmul.mubr.f32.gmra.mxu0 %v706
      %v1148 = vpop.f32.mrf.mxu0
      %v1149 = vadd.f32 %v984, %v1148
      %v1150 = vpop.f32.mrf.mxu0
      %1151 = vmatprep.mubr.f32.mxu0 %v834
      %1152 = vmatmul.mubr.f32.gmra.mxu0 %v714
      %v1153 = vpop.f32.mrf.mxu0
      %v1154 = vadd.f32 %v989, %v1153
      %v1155 = vpop.f32.mrf.mxu0
      %1156 = vmatprep.mubr.f32.mxu0 %v836
      %1157 = vmatmul.mubr.f32.gmra.mxu0 %v722
      %v1158 = vpop.f32.mrf.mxu0
      %v1159 = vadd.f32 %v994, %v1158
      %v1160 = vpop.f32.mrf.mxu0
      %1161 = vmatprep.mubr.f32.mxu0 %v838
      %1162 = vmatmul.mubr.f32.gmra.mxu0 %v730
      %v1163 = vpop.f32.mrf.mxu0
      %v1164 = vadd.f32 %v999, %v1163
      %v1165 = vpop.f32.mrf.mxu0
      %1166 = vmatprep.mubr.f32.mxu0 %v840
      %1167 = vmatmul.mubr.f32.gmra.mxu0 %v738
      %v1168 = vpop.f32.mrf.mxu0
      %v1169 = vadd.f32 %v1004, %v1168
      %v1170 = vpop.f32.mrf.mxu0
      %1171 = vdwg.mxu0
      %v1173 = vsel %vm801, %v307, 0
      %v1175 = vsel %vm801, %v311, 0
      %v1177 = vsel %vm801, %v315, 0
      %v1179 = vsel %vm801, %v319, 0
      %v1181 = vsel %vm801, %v323, 0
      %v1183 = vsel %vm801, %v327, 0
      %v1185 = vsel %vm801, %v331, 0
      %v1187 = vsel %vm801, %v335, 0
      %v1189 = vsel %vm801, %v339, 0
      %v1191 = vsel %vm801, %v343, 0
      %v1193 = vsel %vm801, %v347, 0
      %v1195 = vsel %vm801, %v351, 0
      %v1197 = vsel %vm801, %v355, 0
      %v1199 = vsel %vm801, %v359, 0
      %v1201 = vsel %vm801, %v363, 0
      %v1203 = vsel %vm801, %v367, 0
      %v1205 = vsel %vm801, %v371, 0
      %v1207 = vsel %vm801, %v375, 0
      %v1209 = vsel %vm801, %v379, 0
      %v1211 = vsel %vm801, %v383, 0
      %1213 = vmatprep.subr.mxu0 0.0
      %1214 = vmatpush1.msra.mxu0 %v407
      %1215 = vmatprep.subr.mxu0 0.0
      %1216 = vmatpush1.msra.mxu0 %v406
      %1217 = vmatprep.subr.mxu0 0.0
      %1218 = vmatpush1.msra.mxu0 %v405
      %1219 = vmatprep.subr.mxu0 0.0
      %1220 = vmatpush1.msra.mxu0 %v404
      %1221 = vmatprep.subr.mxu0 0.0
      %1222 = vmatpush1.msra.mxu0 %v403
      %1223 = vmatprep.subr.mxu0 0.0
      %1224 = vmatpush1.msra.mxu0 %v402
      %1225 = vmatprep.subr.mxu0 0.0
      %1226 = vmatpush1.msra.mxu0 %v401
      %1227 = vmatprep.subr.mxu0 0.0
      %1228 = vmatpush1.msra.mxu0 %v400
      %1229 = vmatprep.subr.mxu0 0.0
      %1230 = vmatpush1.msra.mxu0 %v399
      %1231 = vmatprep.subr.mxu0 0.0
      %1232 = vmatpush1.msra.mxu0 %v398
      %1233 = vmatprep.subr.mxu0 0.0
      %1234 = vmatpush1.msra.mxu0 %v397
      %1235 = vmatprep.subr.mxu0 0.0
      %1236 = vmatpush1.msra.mxu0 %v396
      %1237 = vmatprep.subr.mxu0 0.0
      %1238 = vmatpush1.msra.mxu0 %v395
      %1239 = vmatprep.subr.mxu0 0.0
      %1240 = vmatpush1.msra.mxu0 %v394
      %1241 = vmatprep.subr.mxu0 0.0
      %1242 = vmatpush1.msra.mxu0 %v393
      %1243 = vmatprep.subr.mxu0 0.0
      %1244 = vmatpush1.msra.mxu0 %v392
      %1245 = vmatprep.subr.mxu0 0.0
      %1246 = vmatpush2.msra.mxu0 %v423
      %1247 = vmatprep.subr.mxu0 0.0
      %1248 = vmatpush2.msra.mxu0 %v422
      %1249 = vmatprep.subr.mxu0 0.0
      %1250 = vmatpush2.msra.mxu0 %v421
      %1251 = vmatprep.subr.mxu0 0.0
      %1252 = vmatpush2.msra.mxu0 %v420
      %1253 = vmatprep.subr.mxu0 0.0
      %1254 = vmatpush2.msra.mxu0 %v419
      %1255 = vmatprep.subr.mxu0 0.0
      %1256 = vmatpush2.msra.mxu0 %v418
      %1257 = vmatprep.subr.mxu0 0.0
      %1258 = vmatpush2.msra.mxu0 %v417
      %1259 = vmatprep.subr.mxu0 0.0
      %1260 = vmatpush2.msra.mxu0 %v416
      %1261 = vmatprep.subr.mxu0 0.0
      %1262 = vmatpush2.msra.mxu0 %v415
      %1263 = vmatprep.subr.mxu0 0.0
      %1264 = vmatpush2.msra.mxu0 %v414
      %1265 = vmatprep.subr.mxu0 0.0
      %1266 = vmatpush2.msra.mxu0 %v413
      %1267 = vmatprep.subr.mxu0 0.0
      %1268 = vmatpush2.msra.mxu0 %v412
      %1269 = vmatprep.subr.mxu0 0.0
      %1270 = vmatpush2.msra.mxu0 %v411
      %1271 = vmatprep.subr.mxu0 0.0
      %1272 = vmatpush2.msra.mxu0 %v410
      %1273 = vmatprep.subr.mxu0 0.0
      %1274 = vmatpush2.msra.mxu0 %v409
      %1275 = vmatprep.subr.mxu0 0.0
      %1276 = vmatpush2.msra.mxu0 %v408
      %1277 = vmatprep.mubr.f32.mxu0 %v305
      %1278 = vmatmul.mubr.f32.gmra.mxu0 %v304
      %v1279 = vpop.f32.mrf.mxu0
      %v1280 = vadd.f32 %v1074, %v1279
      %v1281 = vpop.f32.mrf.mxu0
      %1282 = vmatprep.mubr.f32.mxu0 %v309
      %1283 = vmatmul.mubr.f32.gmra.mxu0 %v308
      %v1284 = vpop.f32.mrf.mxu0
      %v1285 = vadd.f32 %v1079, %v1284
      %v1286 = vpop.f32.mrf.mxu0
      %1287 = vmatprep.mubr.f32.mxu0 %v313
      %1288 = vmatmul.mubr.f32.gmra.mxu0 %v312
      %v1289 = vpop.f32.mrf.mxu0
      %v1290 = vadd.f32 %v1084, %v1289
      %v1291 = vpop.f32.mrf.mxu0
      %1292 = vmatprep.mubr.f32.mxu0 %v317
      %1293 = vmatmul.mubr.f32.gmra.mxu0 %v316
      %v1294 = vpop.f32.mrf.mxu0
      %v1295 = vadd.f32 %v1089, %v1294
      %v1296 = vpop.f32.mrf.mxu0
      %1297 = vmatprep.mubr.f32.mxu0 %v321
      %1298 = vmatmul.mubr.f32.gmra.mxu0 %v320
      %v1299 = vpop.f32.mrf.mxu0
      %v1300 = vadd.f32 %v1094, %v1299
      %v1301 = vpop.f32.mrf.mxu0
      %1302 = vmatprep.mubr.f32.mxu0 %v325
      %1303 = vmatmul.mubr.f32.gmra.mxu0 %v324
      %v1304 = vpop.f32.mrf.mxu0
      %v1305 = vadd.f32 %v1099, %v1304
      %v1306 = vpop.f32.mrf.mxu0
      %1307 = vmatprep.mubr.f32.mxu0 %v329
      %1308 = vmatmul.mubr.f32.gmra.mxu0 %v328
      %v1309 = vpop.f32.mrf.mxu0
      %v1310 = vadd.f32 %v1104, %v1309
      %v1311 = vpop.f32.mrf.mxu0
      %1312 = vmatprep.mubr.f32.mxu0 %v333
      %1313 = vmatmul.mubr.f32.gmra.mxu0 %v332
      %v1314 = vpop.f32.mrf.mxu0
      %v1315 = vadd.f32 %v1109, %v1314
      %v1316 = vpop.f32.mrf.mxu0
      %1317 = vmatprep.mubr.f32.mxu0 %v337
      %1318 = vmatmul.mubr.f32.gmra.mxu0 %v336
      %v1319 = vpop.f32.mrf.mxu0
      %v1320 = vadd.f32 %v1114, %v1319
      %v1321 = vpop.f32.mrf.mxu0
      %1322 = vmatprep.mubr.f32.mxu0 %v341
      %1323 = vmatmul.mubr.f32.gmra.mxu0 %v340
      %v1324 = vpop.f32.mrf.mxu0
      %v1325 = vadd.f32 %v1119, %v1324
      %v1326 = vpop.f32.mrf.mxu0
      %1327 = vmatprep.mubr.f32.mxu0 %v345
      %1328 = vmatmul.mubr.f32.gmra.mxu0 %v344
      %v1329 = vpop.f32.mrf.mxu0
      %v1330 = vadd.f32 %v1124, %v1329
      %v1331 = vpop.f32.mrf.mxu0
      %1332 = vmatprep.mubr.f32.mxu0 %v349
      %1333 = vmatmul.mubr.f32.gmra.mxu0 %v348
      %v1334 = vpop.f32.mrf.mxu0
      %v1335 = vadd.f32 %v1129, %v1334
      %v1336 = vpop.f32.mrf.mxu0
      %1337 = vmatprep.mubr.f32.mxu0 %v353
      %1338 = vmatmul.mubr.f32.gmra.mxu0 %v352
      %v1339 = vpop.f32.mrf.mxu0
      %v1340 = vadd.f32 %v1134, %v1339
      %v1341 = vpop.f32.mrf.mxu0
      %1342 = vmatprep.mubr.f32.mxu0 %v357
      %1343 = vmatmul.mubr.f32.gmra.mxu0 %v356
      %v1344 = vpop.f32.mrf.mxu0
      %v1345 = vadd.f32 %v1139, %v1344
      %v1346 = vpop.f32.mrf.mxu0
      %1347 = vmatprep.mubr.f32.mxu0 %v361
      %1348 = vmatmul.mubr.f32.gmra.mxu0 %v360
      %v1349 = vpop.f32.mrf.mxu0
      %v1350 = vadd.f32 %v1144, %v1349
      %v1351 = vpop.f32.mrf.mxu0
      %1352 = vmatprep.mubr.f32.mxu0 %v365
      %1353 = vmatmul.mubr.f32.gmra.mxu0 %v364
      %v1354 = vpop.f32.mrf.mxu0
      %v1355 = vadd.f32 %v1149, %v1354
      %v1356 = vpop.f32.mrf.mxu0
      %1357 = vmatprep.mubr.f32.mxu0 %v369
      %1358 = vmatmul.mubr.f32.gmra.mxu0 %v368
      %v1359 = vpop.f32.mrf.mxu0
      %v1360 = vadd.f32 %v1154, %v1359
      %v1361 = vpop.f32.mrf.mxu0
      %1362 = vmatprep.mubr.f32.mxu0 %v373
      %1363 = vmatmul.mubr.f32.gmra.mxu0 %v372
      %v1364 = vpop.f32.mrf.mxu0
      %v1365 = vadd.f32 %v1159, %v1364
      %v1366 = vpop.f32.mrf.mxu0
      %1367 = vmatprep.mubr.f32.mxu0 %v377
      %1368 = vmatmul.mubr.f32.gmra.mxu0 %v376
      %v1369 = vpop.f32.mrf.mxu0
      %v1370 = vadd.f32 %v1164, %v1369
      %v1371 = vpop.f32.mrf.mxu0
      %1372 = vmatprep.mubr.f32.mxu0 %v381
      %1373 = vmatmul.mubr.f32.gmra.mxu0 %v380
      %v1374 = vpop.f32.mrf.mxu0
      %v1375 = vadd.f32 %v1169, %v1374
      %v1376 = vpop.f32.mrf.mxu0
      %1377 = vdwg.mxu0
      %1378 = vmatprep.subr.mxu0 0.0
      %1379 = vmatpush1.msra.mxu0 %v439
      %1380 = vmatprep.subr.mxu0 0.0
      %1381 = vmatpush1.msra.mxu0 %v438
      %1382 = vmatprep.subr.mxu0 0.0
      %1383 = vmatpush1.msra.mxu0 %v437
      %1384 = vmatprep.subr.mxu0 0.0
      %1385 = vmatpush1.msra.mxu0 %v436
      %1386 = vmatprep.subr.mxu0 0.0
      %1387 = vmatpush1.msra.mxu0 %v435
      %1388 = vmatprep.subr.mxu0 0.0
      %1389 = vmatpush1.msra.mxu0 %v434
      %1390 = vmatprep.subr.mxu0 0.0
      %1391 = vmatpush1.msra.mxu0 %v433
      %1392 = vmatprep.subr.mxu0 0.0
      %1393 = vmatpush1.msra.mxu0 %v432
      %1394 = vmatprep.subr.mxu0 0.0
      %1395 = vmatpush1.msra.mxu0 %v431
      %1396 = vmatprep.subr.mxu0 0.0
      %1397 = vmatpush1.msra.mxu0 %v430
      %1398 = vmatprep.subr.mxu0 0.0
      %1399 = vmatpush1.msra.mxu0 %v429
      %1400 = vmatprep.subr.mxu0 0.0
      %1401 = vmatpush1.msra.mxu0 %v428
      %1402 = vmatprep.subr.mxu0 0.0
      %1403 = vmatpush1.msra.mxu0 %v427
      %1404 = vmatprep.subr.mxu0 0.0
      %1405 = vmatpush1.msra.mxu0 %v426
      %1406 = vmatprep.subr.mxu0 0.0
      %1407 = vmatpush1.msra.mxu0 %v425
      %1408 = vmatprep.subr.mxu0 0.0
      %1409 = vmatpush1.msra.mxu0 %v424
      %1410 = vmatprep.subr.mxu0 0.0
      %1411 = vmatpush2.msra.mxu0 0.0
      %1412 = vmatprep.subr.mxu0 0.0
      %1413 = vmatpush2.msra.mxu0 0.0
      %1414 = vmatprep.subr.mxu0 0.0
      %1415 = vmatpush2.msra.mxu0 0.0
      %1416 = vmatprep.subr.mxu0 0.0
      %1417 = vmatpush2.msra.mxu0 0.0
      %1418 = vmatprep.subr.mxu0 0.0
      %1419 = vmatpush2.msra.mxu0 0.0
      %1420 = vmatprep.subr.mxu0 0.0
      %1421 = vmatpush2.msra.mxu0 0.0
      %1422 = vmatprep.subr.mxu0 0.0
      %1423 = vmatpush2.msra.mxu0 0.0
      %1424 = vmatprep.subr.mxu0 0.0
      %1425 = vmatpush2.msra.mxu0 0.0
      %1426 = vmatprep.subr.mxu0 0.0
      %1427 = vmatpush2.msra.mxu0 0.0
      %1428 = vmatprep.subr.mxu0 0.0
      %1429 = vmatpush2.msra.mxu0 0.0
      %1430 = vmatprep.subr.mxu0 0.0
      %1431 = vmatpush2.msra.mxu0 0.0
      %1432 = vmatprep.subr.mxu0 0.0
      %1433 = vmatpush2.msra.mxu0 0.0
      %1434 = vmatprep.subr.mxu0 0.0
      %1435 = vmatpush2.msra.mxu0 0.0
      %1436 = vmatprep.subr.mxu0 0.0
      %1437 = vmatpush2.msra.mxu0 0.0
      %1438 = vmatprep.subr.mxu0 0.0
      %1439 = vmatpush2.msra.mxu0 %v441
      %1440 = vmatprep.subr.mxu0 0.0
      %1441 = vmatpush2.msra.mxu0 %v440
      %1442 = vmatprep.mubr.f32.mxu0 %v1173
      %1443 = vmatmul.mubr.f32.gmra.mxu0 %v306
      %v1444 = vpop.f32.mrf.mxu0
      %v1445 = vadd.f32 %v1280, %v1444
      %v1446 = vpop.f32.mrf.mxu0
      %1447 = vmatprep.mubr.f32.mxu0 %v1175
      %1448 = vmatmul.mubr.f32.gmra.mxu0 %v310
      %v1449 = vpop.f32.mrf.mxu0
      %v1450 = vadd.f32 %v1285, %v1449
      %v1451 = vpop.f32.mrf.mxu0
      %1452 = vmatprep.mubr.f32.mxu0 %v1177
      %1453 = vmatmul.mubr.f32.gmra.mxu0 %v314
      %v1454 = vpop.f32.mrf.mxu0
      %v1455 = vadd.f32 %v1290, %v1454
      %v1456 = vpop.f32.mrf.mxu0
      %1457 = vmatprep.mubr.f32.mxu0 %v1179
      %1458 = vmatmul.mubr.f32.gmra.mxu0 %v318
      %v1459 = vpop.f32.mrf.mxu0
      %v1460 = vadd.f32 %v1295, %v1459
      %v1461 = vpop.f32.mrf.mxu0
      %1462 = vmatprep.mubr.f32.mxu0 %v1181
      %1463 = vmatmul.mubr.f32.gmra.mxu0 %v322
      %v1464 = vpop.f32.mrf.mxu0
      %v1465 = vadd.f32 %v1300, %v1464
      %v1466 = vpop.f32.mrf.mxu0
      %1467 = vmatprep.mubr.f32.mxu0 %v1183
      %1468 = vmatmul.mubr.f32.gmra.mxu0 %v326
      %v1469 = vpop.f32.mrf.mxu0
      %v1470 = vadd.f32 %v1305, %v1469
      %v1471 = vpop.f32.mrf.mxu0
      %1472 = vmatprep.mubr.f32.mxu0 %v1185
      %1473 = vmatmul.mubr.f32.gmra.mxu0 %v330
      %v1474 = vpop.f32.mrf.mxu0
      %v1475 = vadd.f32 %v1310, %v1474
      %v1476 = vpop.f32.mrf.mxu0
      %1477 = vmatprep.mubr.f32.mxu0 %v1187
      %1478 = vmatmul.mubr.f32.gmra.mxu0 %v334
      %v1479 = vpop.f32.mrf.mxu0
      %v1480 = vadd.f32 %v1315, %v1479
      %v1481 = vpop.f32.mrf.mxu0
      %1482 = vmatprep.mubr.f32.mxu0 %v1189
      %1483 = vmatmul.mubr.f32.gmra.mxu0 %v338
      %v1484 = vpop.f32.mrf.mxu0
      %v1485 = vadd.f32 %v1320, %v1484
      %v1486 = vpop.f32.mrf.mxu0
      %1487 = vmatprep.mubr.f32.mxu0 %v1191
      %1488 = vmatmul.mubr.f32.gmra.mxu0 %v342
      %v1489 = vpop.f32.mrf.mxu0
      %v1490 = vadd.f32 %v1325, %v1489
      %v1491 = vpop.f32.mrf.mxu0
      %1492 = vmatprep.mubr.f32.mxu0 %v1193
      %1493 = vmatmul.mubr.f32.gmra.mxu0 %v346
      %v1494 = vpop.f32.mrf.mxu0
      %v1495 = vadd.f32 %v1330, %v1494
      %v1496 = vpop.f32.mrf.mxu0
      %1497 = vmatprep.mubr.f32.mxu0 %v1195
      %1498 = vmatmul.mubr.f32.gmra.mxu0 %v350
      %v1499 = vpop.f32.mrf.mxu0
      %v1500 = vadd.f32 %v1335, %v1499
      %v1501 = vpop.f32.mrf.mxu0
      %1502 = vmatprep.mubr.f32.mxu0 %v1197
      %1503 = vmatmul.mubr.f32.gmra.mxu0 %v354
      %v1504 = vpop.f32.mrf.mxu0
      %v1505 = vadd.f32 %v1340, %v1504
      %v1506 = vpop.f32.mrf.mxu0
      %1507 = vmatprep.mubr.f32.mxu0 %v1199
      %1508 = vmatmul.mubr.f32.gmra.mxu0 %v358
      %v1509 = vpop.f32.mrf.mxu0
      %v1510 = vadd.f32 %v1345, %v1509
      %v1511 = vpop.f32.mrf.mxu0
      %1512 = vmatprep.mubr.f32.mxu0 %v1201
      %1513 = vmatmul.mubr.f32.gmra.mxu0 %v362
      %v1514 = vpop.f32.mrf.mxu0
      %v1515 = vadd.f32 %v1350, %v1514
      %v1516 = vpop.f32.mrf.mxu0
      %1517 = vmatprep.mubr.f32.mxu0 %v1203
      %1518 = vmatmul.mubr.f32.gmra.mxu0 %v366
      %v1519 = vpop.f32.mrf.mxu0
      %v1520 = vadd.f32 %v1355, %v1519
      %v1521 = vpop.f32.mrf.mxu0
      %1522 = vmatprep.mubr.f32.mxu0 %v1205
      %1523 = vmatmul.mubr.f32.gmra.mxu0 %v370
      %v1524 = vpop.f32.mrf.mxu0
      %v1525 = vadd.f32 %v1360, %v1524
      %v1526 = vpop.f32.mrf.mxu0
      %1527 = vmatprep.mubr.f32.mxu0 %v1207
      %1528 = vmatmul.mubr.f32.gmra.mxu0 %v374
      %v1529 = vpop.f32.mrf.mxu0
      %v1530 = vadd.f32 %v1365, %v1529
      %v1531 = vpop.f32.mrf.mxu0
      %1532 = vmatprep.mubr.f32.mxu0 %v1209
      %1533 = vmatmul.mubr.f32.gmra.mxu0 %v378
      %v1534 = vpop.f32.mrf.mxu0
      %v1535 = vadd.f32 %v1370, %v1534
      %v1536 = vpop.f32.mrf.mxu0
      %1537 = vmatprep.mubr.f32.mxu0 %v1211
      %1538 = vmatmul.mubr.f32.gmra.mxu0 %v382
      %v1539 = vpop.f32.mrf.mxu0
      %v1540 = vadd.f32 %v1375, %v1539
      %v1541 = vpop.f32.mrf.mxu0
      %1542 = vdwg.mxu0
      %v1543 = vmax.f32 %v1445, 0.0
      %v1544 = vmax.f32 %v1450, 0.0
      %v1545 = vmax.f32 %v1455, 0.0
      %v1546 = vmax.f32 %v1460, 0.0
      %v1547 = vmax.f32 %v1465, 0.0
      %v1548 = vmax.f32 %v1470, 0.0
      %v1549 = vmax.f32 %v1475, 0.0
      %v1550 = vmax.f32 %v1480, 0.0
      %v1551 = vmax.f32 %v1485, 0.0
      %v1552 = vmax.f32 %v1490, 0.0
      %v1553 = vmax.f32 %v1495, 0.0
      %v1554 = vmax.f32 %v1500, 0.0
      %v1555 = vmax.f32 %v1505, 0.0
      %v1556 = vmax.f32 %v1510, 0.0
      %v1557 = vmax.f32 %v1515, 0.0
      %v1558 = vmax.f32 %v1520, 0.0
      %v1559 = vmax.f32 %v1525, 0.0
      %v1560 = vmax.f32 %v1530, 0.0
      %v1561 = vmax.f32 %v1535, 0.0
      %v1562 = vmax.f32 %v1540, 0.0
      %vm1563 = vcmask 254976
      %1564 = vst.msk [vmem:[#allocation2] sm:$0x3] %vm1563, 0.0
      %vm1565 = vcmask 261120
      %1566 = vst.msk [vmem:[#allocation2 + $0x2] sm:$0xff] %vm1565, %v1543
      %1567 = vst.msk [vmem:[#allocation2 + $0xa] sm:$0xff] %vm1565, %v1544
      %1568 = vst.msk [vmem:[#allocation2 + $0x12] sm:$0xff] %vm1565, %v1545
      %1569 = vst.msk [vmem:[#allocation2 + $0x1a] sm:$0xff] %vm1565, %v1546
      %1570 = vst.msk [vmem:[#allocation2 + $0x22] sm:$0xff] %vm1565, %v1547
      %1571 = vst.msk [vmem:[#allocation2 + $0x2a] sm:$0xff] %vm1565, %v1548
      %1572 = vst.msk [vmem:[#allocation2 + $0x32] sm:$0xff] %vm1565, %v1549
      %1573 = vst.msk [vmem:[#allocation2 + $0x3a] sm:$0xff] %vm1565, %v1550
      %1574 = vst.msk [vmem:[#allocation2 + $0x42] sm:$0xff] %vm1565, %v1551
      %1575 = vst.msk [vmem:[#allocation2 + $0x4a] sm:$0xff] %vm1565, %v1552
      %1576 = vst.msk [vmem:[#allocation2 + $0x52] sm:$0xff] %vm1565, %v1553
      %1577 = vst.msk [vmem:[#allocation2 + $0x5a] sm:$0xff] %vm1565, %v1554
      %1578 = vst.msk [vmem:[#allocation2 + $0x62] sm:$0xff] %vm1565, %v1555
      %1579 = vst.msk [vmem:[#allocation2 + $0x6a] sm:$0xff] %vm1565, %v1556
      %1580 = vst.msk [vmem:[#allocation2 + $0x72] sm:$0xff] %vm1565, %v1557
      %1581 = vst.msk [vmem:[#allocation2 + $0x7a] sm:$0xff] %vm1565, %v1558
      %1582 = vst.msk [vmem:[#allocation2 + $0x82] sm:$0xff] %vm1565, %v1559
      %1583 = vst.msk [vmem:[#allocation2 + $0x8a] sm:$0xff] %vm1565, %v1560
      %1584 = vst.msk [vmem:[#allocation2 + $0x92] sm:$0xff] %vm1565, %v1561
      %1585 = vst.msk [vmem:[#allocation2 + $0x9a] sm:$0xff] %vm1565, %v1562
      %1586 = vst.msk [vmem:[#allocation2 + $0xa2] sm:$0x3] %vm1563, 0.0
      %v1587 = vld [vmem:[#allocation2] ss:$4 sm:$0xff]
      %s1588 = scalar_lea.vmem [#allocation2], 32
      %v1589 = vld [vmem:[%s1588] ss:$4 sm:$0xff]
      %s1590 = scalar_lea.vmem [#allocation2], 64
      %v1591 = vld [vmem:[%s1590] ss:$4 sm:$0xff]
      %s1592 = scalar_lea.vmem [#allocation2], 96
      %v1593 = vld [vmem:[%s1592] ss:$4 sm:$0xff]
      %s1594 = scalar_lea.vmem [#allocation2], 128
      %v1595 = vld [vmem:[%s1594] ss:$4 sm:$0xff]
      %1596 = vst.msk [vmem:[#allocation3] sm:$0xff] %vm1565, %v1587
      %1597 = vst.msk [vmem:[#allocation3 + $0x10] sm:$0xff] %vm1565, %v1589
      %1598 = vst.msk [vmem:[#allocation3 + $0x20] sm:$0xff] %vm1565, %v1591
      %1599 = vst.msk [vmem:[#allocation3 + $0x30] sm:$0xff] %vm1565, %v1593
      %1600 = vst.msk [vmem:[#allocation3 + $0x40] sm:$0xff] %vm1565, %v1595
      %s1601 = scalar_lea.vmem [#allocation2], 1
      %v1602 = vld [vmem:[%s1601] ss:$4 sm:$0xff]
      %s1603 = scalar_lea.vmem [#allocation2], 33
      %v1604 = vld [vmem:[%s1603] ss:$4 sm:$0xff]
      %s1605 = scalar_lea.vmem [#allocation2], 65
      %v1606 = vld [vmem:[%s1605] ss:$4 sm:$0xff]
      %s1607 = scalar_lea.vmem [#allocation2], 97
      %v1608 = vld [vmem:[%s1607] ss:$4 sm:$0xff]
      %s1609 = scalar_lea.vmem [#allocation2], 129
      %v1610 = vld [vmem:[%s1609] ss:$4 sm:$0xff]
      %1616 = vrot.lane.b32.xlu0 %v1602, 32
      %v1617 = vpop.permute.xlu0 %1616
      %1618 = vrot.lane.b32.xlu0 %v1604, 32
      %v1619 = vpop.permute.xlu0 %1618
      %1620 = vrot.lane.b32.xlu0 %v1606, 32
      %v1621 = vpop.permute.xlu0 %1620
      %1622 = vrot.lane.b32.xlu0 %v1608, 32
      %v1623 = vpop.permute.xlu0 %1622
      %1624 = vrot.lane.b32.xlu0 %v1610, 32
      %v1625 = vpop.permute.xlu0 %1624
      %vm1631 = vcmask 523520
      %1632 = vst.msk [vmem:[#allocation3] sm:$0xff] %vm1631, %v1617
      %1633 = vst.msk [vmem:[#allocation3 + $0x10] sm:$0xff] %vm1631, %v1619
      %1634 = vst.msk [vmem:[#allocation3 + $0x20] sm:$0xff] %vm1631, %v1621
      %1635 = vst.msk [vmem:[#allocation3 + $0x30] sm:$0xff] %vm1631, %v1623
      %1636 = vst.msk [vmem:[#allocation3 + $0x40] sm:$0xff] %vm1631, %v1625
      %s1637 = scalar_lea.vmem [#allocation2], 2
      %v1638 = vld [vmem:[%s1637] ss:$4 sm:$0xff]
      %s1639 = scalar_lea.vmem [#allocation2], 34
      %v1640 = vld [vmem:[%s1639] ss:$4 sm:$0xff]
      %s1641 = scalar_lea.vmem [#allocation2], 66
      %v1642 = vld [vmem:[%s1641] ss:$4 sm:$0xff]
      %s1643 = scalar_lea.vmem [#allocation2], 98
      %v1644 = vld [vmem:[%s1643] ss:$4 sm:$0xff]
      %s1645 = scalar_lea.vmem [#allocation2], 130
      %v1646 = vld [vmem:[%s1645] ss:$4 sm:$0xff]
      %1652 = vrot.lane.b32.xlu0 %v1638, 64
      %v1653 = vpop.permute.xlu0 %1652
      %1654 = vrot.lane.b32.xlu0 %v1640, 64
      %v1655 = vpop.permute.xlu0 %1654
      %1656 = vrot.lane.b32.xlu0 %v1642, 64
      %v1657 = vpop.permute.xlu0 %1656
      %1658 = vrot.lane.b32.xlu0 %v1644, 64
      %v1659 = vpop.permute.xlu0 %1658
      %1660 = vrot.lane.b32.xlu0 %v1646, 64
      %v1661 = vpop.permute.xlu0 %1660
      %vm1667 = vcmask 785920
      %1668 = vst.msk [vmem:[#allocation3] sm:$0xff] %vm1667, %v1653
      %1669 = vst.msk [vmem:[#allocation3 + $0x10] sm:$0xff] %vm1667, %v1655
      %1670 = vst.msk [vmem:[#allocation3 + $0x20] sm:$0xff] %vm1667, %v1657
      %1671 = vst.msk [vmem:[#allocation3 + $0x30] sm:$0xff] %vm1667, %v1659
      %1672 = vst.msk [vmem:[#allocation3 + $0x40] sm:$0xff] %vm1667, %v1661
      %s1673 = scalar_lea.vmem [#allocation2], 3
      %v1674 = vld [vmem:[%s1673] ss:$4 sm:$0xff]
      %s1675 = scalar_lea.vmem [#allocation2], 35
      %v1676 = vld [vmem:[%s1675] ss:$4 sm:$0xff]
      %s1677 = scalar_lea.vmem [#allocation2], 67
      %v1678 = vld [vmem:[%s1677] ss:$4 sm:$0xff]
      %s1679 = scalar_lea.vmem [#allocation2], 99
      %v1680 = vld [vmem:[%s1679] ss:$4 sm:$0xff]
      %s1681 = scalar_lea.vmem [#allocation2], 131
      %v1682 = vld [vmem:[%s1681] ss:$4 sm:$0xff]
      %1688 = vrot.lane.b32.xlu0 %v1674, 96
      %v1689 = vpop.permute.xlu0 %1688
      %1690 = vrot.lane.b32.xlu0 %v1676, 96
      %v1691 = vpop.permute.xlu0 %1690
      %1692 = vrot.lane.b32.xlu0 %v1678, 96
      %v1693 = vpop.permute.xlu0 %1692
      %1694 = vrot.lane.b32.xlu0 %v1680, 96
      %v1695 = vpop.permute.xlu0 %1694
      %1696 = vrot.lane.b32.xlu0 %v1682, 96
      %v1697 = vpop.permute.xlu0 %1696
      %vm1703 = vcmask 1048320
      %1704 = vst.msk [vmem:[#allocation3] sm:$0xff] %vm1703, %v1689
      %1705 = vst.msk [vmem:[#allocation3 + $0x10] sm:$0xff] %vm1703, %v1691
      %1706 = vst.msk [vmem:[#allocation3 + $0x20] sm:$0xff] %vm1703, %v1693
      %1707 = vst.msk [vmem:[#allocation3 + $0x30] sm:$0xff] %vm1703, %v1695
      %1708 = vst.msk [vmem:[#allocation3 + $0x40] sm:$0xff] %vm1703, %v1697
      %s1709 = scalar_lea.vmem [#allocation2], 4
      %v1710 = vld [vmem:[%s1709] ss:$4 sm:$0xff]
      %s1711 = scalar_lea.vmem [#allocation2], 36
      %v1712 = vld [vmem:[%s1711] ss:$4 sm:$0xff]
      %s1713 = scalar_lea.vmem [#allocation2], 68
      %v1714 = vld [vmem:[%s1713] ss:$4 sm:$0xff]
      %s1715 = scalar_lea.vmem [#allocation2], 100
      %v1716 = vld [vmem:[%s1715] ss:$4 sm:$0xff]
      %s1717 = scalar_lea.vmem [#allocation2], 132
      %v1718 = vld [vmem:[%s1717] ss:$4 sm:$0xff]
      %1719 = vst.msk [vmem:[#allocation3 + $0x8] sm:$0xff] %vm1565, %v1710
      %1720 = vst.msk [vmem:[#allocation3 + $0x18] sm:$0xff] %vm1565, %v1712
      %1721 = vst.msk [vmem:[#allocation3 + $0x28] sm:$0xff] %vm1565, %v1714
      %1722 = vst.msk [vmem:[#allocation3 + $0x38] sm:$0xff] %vm1565, %v1716
      %1723 = vst.msk [vmem:[#allocation3 + $0x48] sm:$0xff] %vm1565, %v1718
      %s1724 = scalar_lea.vmem [#allocation2], 5
      %v1725 = vld [vmem:[%s1724] ss:$4 sm:$0xff]
      %s1726 = scalar_lea.vmem [#allocation2], 37
      %v1727 = vld [vmem:[%s1726] ss:$4 sm:$0xff]
      %s1728 = scalar_lea.vmem [#allocation2], 69
      %v1729 = vld [vmem:[%s1728] ss:$4 sm:$0xff]
      %s1730 = scalar_lea.vmem [#allocation2], 101
      %v1731 = vld [vmem:[%s1730] ss:$4 sm:$0xff]
      %s1732 = scalar_lea.vmem [#allocation2], 133
      %v1733 = vld [vmem:[%s1732] ss:$4 sm:$0xff]
      %1739 = vrot.lane.b32.xlu0 %v1725, 32
      %v1740 = vpop.permute.xlu0 %1739
      %1741 = vrot.lane.b32.xlu0 %v1727, 32
      %v1742 = vpop.permute.xlu0 %1741
      %1743 = vrot.lane.b32.xlu0 %v1729, 32
      %v1744 = vpop.permute.xlu0 %1743
      %1745 = vrot.lane.b32.xlu0 %v1731, 32
      %v1746 = vpop.permute.xlu0 %1745
      %1747 = vrot.lane.b32.xlu0 %v1733, 32
      %v1748 = vpop.permute.xlu0 %1747
      %1754 = vst.msk [vmem:[#allocation3 + $0x8] sm:$0xff] %vm1631, %v1740
      %1755 = vst.msk [vmem:[#allocation3 + $0x18] sm:$0xff] %vm1631, %v1742
      %1756 = vst.msk [vmem:[#allocation3 + $0x28] sm:$0xff] %vm1631, %v1744
      %1757 = vst.msk [vmem:[#allocation3 + $0x38] sm:$0xff] %vm1631, %v1746
      %1758 = vst.msk [vmem:[#allocation3 + $0x48] sm:$0xff] %vm1631, %v1748
      %s1759 = scalar_lea.vmem [#allocation2], 6
      %v1760 = vld [vmem:[%s1759] ss:$4 sm:$0xff]
      %s1761 = scalar_lea.vmem [#allocation2], 38
      %v1762 = vld [vmem:[%s1761] ss:$4 sm:$0xff]
      %s1763 = scalar_lea.vmem [#allocation2], 70
      %v1764 = vld [vmem:[%s1763] ss:$4 sm:$0xff]
      %s1765 = scalar_lea.vmem [#allocation2], 102
      %v1766 = vld [vmem:[%s1765] ss:$4 sm:$0xff]
      %s1767 = scalar_lea.vmem [#allocation2], 134
      %v1768 = vld [vmem:[%s1767] ss:$4 sm:$0xff]
      %1774 = vrot.lane.b32.xlu0 %v1760, 64
      %v1775 = vpop.permute.xlu0 %1774
      %1776 = vrot.lane.b32.xlu0 %v1762, 64
      %v1777 = vpop.permute.xlu0 %1776
      %1778 = vrot.lane.b32.xlu0 %v1764, 64
      %v1779 = vpop.permute.xlu0 %1778
      %1780 = vrot.lane.b32.xlu0 %v1766, 64
      %v1781 = vpop.permute.xlu0 %1780
      %1782 = vrot.lane.b32.xlu0 %v1768, 64
      %v1783 = vpop.permute.xlu0 %1782
      %1789 = vst.msk [vmem:[#allocation3 + $0x8] sm:$0xff] %vm1667, %v1775
      %1790 = vst.msk [vmem:[#allocation3 + $0x18] sm:$0xff] %vm1667, %v1777
      %1791 = vst.msk [vmem:[#allocation3 + $0x28] sm:$0xff] %vm1667, %v1779
      %1792 = vst.msk [vmem:[#allocation3 + $0x38] sm:$0xff] %vm1667, %v1781
      %1793 = vst.msk [vmem:[#allocation3 + $0x48] sm:$0xff] %vm1667, %v1783
      %s1794 = scalar_lea.vmem [#allocation2], 7
      %v1795 = vld [vmem:[%s1794] ss:$4 sm:$0xff]
      %s1796 = scalar_lea.vmem [#allocation2], 39
      %v1797 = vld [vmem:[%s1796] ss:$4 sm:$0xff]
      %s1798 = scalar_lea.vmem [#allocation2], 71
      %v1799 = vld [vmem:[%s1798] ss:$4 sm:$0xff]
      %s1800 = scalar_lea.vmem [#allocation2], 103
      %v1801 = vld [vmem:[%s1800] ss:$4 sm:$0xff]
      %s1802 = scalar_lea.vmem [#allocation2], 135
      %v1803 = vld [vmem:[%s1802] ss:$4 sm:$0xff]
      %1809 = vrot.lane.b32.xlu0 %v1795, 96
      %v1810 = vpop.permute.xlu0 %1809
      %1811 = vrot.lane.b32.xlu0 %v1797, 96
      %v1812 = vpop.permute.xlu0 %1811
      %1813 = vrot.lane.b32.xlu0 %v1799, 96
      %v1814 = vpop.permute.xlu0 %1813
      %1815 = vrot.lane.b32.xlu0 %v1801, 96
      %v1816 = vpop.permute.xlu0 %1815
      %1817 = vrot.lane.b32.xlu0 %v1803, 96
      %v1818 = vpop.permute.xlu0 %1817
      %1824 = vst.msk [vmem:[#allocation3 + $0x8] sm:$0xff] %vm1703, %v1810
      %1825 = vst.msk [vmem:[#allocation3 + $0x18] sm:$0xff] %vm1703, %v1812
      %1826 = vst.msk [vmem:[#allocation3 + $0x28] sm:$0xff] %vm1703, %v1814
      %1827 = vst.msk [vmem:[#allocation3 + $0x38] sm:$0xff] %vm1703, %v1816
      %1828 = vst.msk [vmem:[#allocation3 + $0x48] sm:$0xff] %vm1703, %v1818
      %v1829 = vld [vmem:[#allocation3] sm:$0xff]
      %v1830 = vld [vmem:[#allocation3 + $0x8] sm:$0xff]
      %v1831 = vld [vmem:[#allocation3 + $0x10] sm:$0xff]
      %v1832 = vld [vmem:[#allocation3 + $0x18] sm:$0xff]
      %v1833 = vld [vmem:[#allocation3 + $0x20] sm:$0xff]
      %v1834 = vld [vmem:[#allocation3 + $0x28] sm:$0xff]
      %v1835 = vld [vmem:[#allocation3 + $0x30] sm:$0xff]
      %v1836 = vld [vmem:[#allocation3 + $0x38] sm:$0xff]
      %v1837 = vld [vmem:[#allocation3 + $0x40] sm:$0xff]
      %v1838 = vld [vmem:[#allocation3 + $0x48] sm:$0xff]
      %v1839 = vld [vmem:[%s2] sm:$0xff]
      %v1840 = vld [vmem:[%s2 + $0x8] sm:$0xff]
      %v1841 = vld [vmem:[%s2 + $0x10] sm:$0xff]
      %v1842 = vld [vmem:[%s2 + $0x18] sm:$0xff]
      %v1843 = vld [vmem:[%s2 + $0x20] sm:$0xff]
      %v1844 = vld [vmem:[%s2 + $0x28] sm:$0xff]
      %v1845 = vld [vmem:[%s2 + $0x30] sm:$0xff]
      %v1846 = vld [vmem:[%s2 + $0x38] sm:$0xff]
      %v1847 = vld [vmem:[%s2 + $0x40] sm:$0xff]
      %v1848 = vld [vmem:[%s2 + $0x48] sm:$0xff]
      %v1849 = vld [vmem:[%s2 + $0x50] sm:$0xff]
      %v1850 = vld [vmem:[%s2 + $0x58] sm:$0xff]
      %v1851 = vld [vmem:[%s2 + $0x60] sm:$0xff]
      %v1852 = vld [vmem:[%s2 + $0x68] sm:$0xff]
      %v1853 = vld [vmem:[%s2 + $0x70] sm:$0xff]
      %v1854 = vld [vmem:[%s2 + $0x78] sm:$0xff]
      %v1855 = vld [vmem:[%s2 + $0x80] sm:$0xff]
      %v1856 = vld [vmem:[%s2 + $0x88] sm:$0xff]
      %v1857 = vld [vmem:[%s2 + $0x90] sm:$0xff]
      %v1858 = vld [vmem:[%s2 + $0x98] sm:$0xff]
      %v1859 = vld [vmem:[%s2 + $0xa0] sm:$0xff]
      %v1860 = vld [vmem:[%s2 + $0xa8] sm:$0xff]
      %v1861 = vld [vmem:[%s2 + $0xb0] sm:$0xff]
      %v1862 = vld [vmem:[%s2 + $0xb8] sm:$0xff]
      %v1863 = vld [vmem:[%s2 + $0xc0] sm:$0xff]
      %v1864 = vld [vmem:[%s2 + $0xc8] sm:$0xff]
      %v1865 = vld [vmem:[%s2 + $0xd0] sm:$0xff]
      %v1866 = vld [vmem:[%s2 + $0xd8] sm:$0xff]
      %v1867 = vld [vmem:[%s2 + $0xe0] sm:$0xff]
      %v1868 = vld [vmem:[%s2 + $0xe8] sm:$0xff]
      %v1869 = vld [vmem:[%s2 + $0xf0] sm:$0xff]
      %v1870 = vld [vmem:[%s2 + $0xf8] sm:$0xff]
      %1871 = vmatprep.subr.mxu0 0.0
      %1872 = vmatpush1.msra.mxu0 %v1854
      %1873 = vmatprep.subr.mxu0 0.0
      %1874 = vmatpush1.msra.mxu0 %v1853
      %1875 = vmatprep.subr.mxu0 0.0
      %1876 = vmatpush1.msra.mxu0 %v1852
      %1877 = vmatprep.subr.mxu0 0.0
      %1878 = vmatpush1.msra.mxu0 %v1851
      %1879 = vmatprep.subr.mxu0 0.0
      %1880 = vmatpush1.msra.mxu0 %v1850
      %1881 = vmatprep.subr.mxu0 0.0
      %1882 = vmatpush1.msra.mxu0 %v1849
      %1883 = vmatprep.subr.mxu0 0.0
      %1884 = vmatpush1.msra.mxu0 %v1848
      %1885 = vmatprep.subr.mxu0 0.0
      %1886 = vmatpush1.msra.mxu0 %v1847
      %1887 = vmatprep.subr.mxu0 0.0
      %1888 = vmatpush1.msra.mxu0 %v1846
      %1889 = vmatprep.subr.mxu0 0.0
      %1890 = vmatpush1.msra.mxu0 %v1845
      %1891 = vmatprep.subr.mxu0 0.0
      %1892 = vmatpush1.msra.mxu0 %v1844
      %1893 = vmatprep.subr.mxu0 0.0
      %1894 = vmatpush1.msra.mxu0 %v1843
      %1895 = vmatprep.subr.mxu0 0.0
      %1896 = vmatpush1.msra.mxu0 %v1842
      %1897 = vmatprep.subr.mxu0 0.0
      %1898 = vmatpush1.msra.mxu0 %v1841
      %1899 = vmatprep.subr.mxu0 0.0
      %1900 = vmatpush1.msra.mxu0 %v1840
      %1901 = vmatprep.subr.mxu0 0.0
      %1902 = vmatpush1.msra.mxu0 %v1839
      %1903 = vmatprep.subr.mxu0 0.0
      %1904 = vmatpush2.msra.mxu0 %v1870
      %1905 = vmatprep.subr.mxu0 0.0
      %1906 = vmatpush2.msra.mxu0 %v1869
      %1907 = vmatprep.subr.mxu0 0.0
      %1908 = vmatpush2.msra.mxu0 %v1868
      %1909 = vmatprep.subr.mxu0 0.0
      %1910 = vmatpush2.msra.mxu0 %v1867
      %1911 = vmatprep.subr.mxu0 0.0
      %1912 = vmatpush2.msra.mxu0 %v1866
      %1913 = vmatprep.subr.mxu0 0.0
      %1914 = vmatpush2.msra.mxu0 %v1865
      %1915 = vmatprep.subr.mxu0 0.0
      %1916 = vmatpush2.msra.mxu0 %v1864
      %1917 = vmatprep.subr.mxu0 0.0
      %1918 = vmatpush2.msra.mxu0 %v1863
      %1919 = vmatprep.subr.mxu0 0.0
      %1920 = vmatpush2.msra.mxu0 %v1862
      %1921 = vmatprep.subr.mxu0 0.0
      %1922 = vmatpush2.msra.mxu0 %v1861
      %1923 = vmatprep.subr.mxu0 0.0
      %1924 = vmatpush2.msra.mxu0 %v1860
      %1925 = vmatprep.subr.mxu0 0.0
      %1926 = vmatpush2.msra.mxu0 %v1859
      %1927 = vmatprep.subr.mxu0 0.0
      %1928 = vmatpush2.msra.mxu0 %v1858
      %1929 = vmatprep.subr.mxu0 0.0
      %1930 = vmatpush2.msra.mxu0 %v1857
      %1931 = vmatprep.subr.mxu0 0.0
      %1932 = vmatpush2.msra.mxu0 %v1856
      %1933 = vmatprep.subr.mxu0 0.0
      %1934 = vmatpush2.msra.mxu0 %v1855
      %1935 = vmatprep.mubr.f32.mxu0 %v1830
      %1936 = vmatmul.mubr.f32.gmra.mxu0 %v1829
      %v1937 = vpop.f32.mrf.mxu0
      %v1938 = vadd.f32 0.0, %v1937
      %v1939 = vpop.f32.mrf.mxu0
      %1940 = vmatprep.mubr.f32.mxu0 %v1832
      %1941 = vmatmul.mubr.f32.gmra.mxu0 %v1831
      %v1942 = vpop.f32.mrf.mxu0
      %v1943 = vadd.f32 0.0, %v1942
      %v1944 = vpop.f32.mrf.mxu0
      %1945 = vmatprep.mubr.f32.mxu0 %v1834
      %1946 = vmatmul.mubr.f32.gmra.mxu0 %v1833
      %v1947 = vpop.f32.mrf.mxu0
      %v1948 = vadd.f32 0.0, %v1947
      %v1949 = vpop.f32.mrf.mxu0
      %1950 = vmatprep.mubr.f32.mxu0 %v1836
      %1951 = vmatmul.mubr.f32.gmra.mxu0 %v1835
      %v1952 = vpop.f32.mrf.mxu0
      %v1953 = vadd.f32 0.0, %v1952
      %v1954 = vpop.f32.mrf.mxu0
      %1955 = vmatprep.mubr.f32.mxu0 %v1838
      %1956 = vmatmul.mubr.f32.gmra.mxu0 %v1837
      %v1957 = vpop.f32.mrf.mxu0
      %v1958 = vadd.f32 0.0, %v1957
      %v1959 = vpop.f32.mrf.mxu0
      %1960 = vdwg.mxu0
      %v1961 = vmax.f32 %v1938, 0.0
      %v1962 = vmax.f32 %v1943, 0.0
      %v1963 = vmax.f32 %v1948, 0.0
      %v1964 = vmax.f32 %v1953, 0.0
      %v1965 = vmax.f32 %v1958, 0.0
      %vm1966 = vcmask 253952
      %1967 = vst.msk [vmem:[#allocation4] sm:$0x1] %vm1966, 0.0
      %1968 = vst.msk [vmem:[#allocation4 + $0x1] sm:$0xff] %vm1565, %v1961
      %1969 = vst.msk [vmem:[#allocation4 + $0x9] sm:$0xff] %vm1565, %v1962
      %1970 = vst.msk [vmem:[#allocation4 + $0x11] sm:$0xff] %vm1565, %v1963
      %1971 = vst.msk [vmem:[#allocation4 + $0x19] sm:$0xff] %vm1565, %v1964
      %1972 = vst.msk [vmem:[#allocation4 + $0x21] sm:$0xff] %vm1565, %v1965
      %1973 = vst.msk [vmem:[#allocation4 + $0x29] sm:$0x1] %vm1966, 0.0
      %v1974 = vld [vmem:[#allocation4] ss:$2 sm:$0xff]
      %s1975 = scalar_lea.vmem [#allocation4], 16
      %v1976 = vld [vmem:[%s1975] ss:$2 sm:$0xff]
      %s1977 = scalar_lea.vmem [#allocation4], 32
      %v1978 = vld [vmem:[%s1977] ss:$2 sm:$0xf]
      %1979 = vst.msk [vmem:[#allocation5] sm:$0xff] %vm1565, %v1974
      %1980 = vst.msk [vmem:[#allocation5 + $0x8] sm:$0xff] %vm1565, %v1976
      %vm1981 = vcmask 257024
      %1982 = vst.msk [vmem:[#allocation5 + $0x10] sm:$0xf] %vm1981, %v1978
      %s1983 = scalar_lea.vmem [#allocation4], 1
      %v1984 = vld [vmem:[%s1983] ss:$2 sm:$0xff]
      %s1985 = scalar_lea.vmem [#allocation4], 17
      %v1986 = vld [vmem:[%s1985] ss:$2 sm:$0xff]
      %s1987 = scalar_lea.vmem [#allocation4], 33
      %v1988 = vld [vmem:[%s1987] ss:$2 sm:$0xf]
      %1992 = vrot.lane.b32.xlu0 %v1984, 32
      %v1993 = vpop.permute.xlu0 %1992
      %1994 = vrot.lane.b32.xlu0 %v1986, 32
      %v1995 = vpop.permute.xlu0 %1994
      %1996 = vrot.lane.b32.xlu0 %v1988, 32
      %v1997 = vpop.permute.xlu0 %1996
      %2001 = vst.msk [vmem:[#allocation5] sm:$0xff] %vm1631, %v1993
      %2002 = vst.msk [vmem:[#allocation5 + $0x8] sm:$0xff] %vm1631, %v1995
      %vm2003 = vcmask 519424
      %2004 = vst.msk [vmem:[#allocation5 + $0x10] sm:$0xf] %vm2003, %v1997
      %s2005 = scalar_lea.vmem [#allocation4], 2
      %v2006 = vld [vmem:[%s2005] ss:$2 sm:$0xff]
      %s2007 = scalar_lea.vmem [#allocation4], 18
      %v2008 = vld [vmem:[%s2007] ss:$2 sm:$0xff]
      %s2009 = scalar_lea.vmem [#allocation4], 34
      %v2010 = vld [vmem:[%s2009] ss:$2 sm:$0xf]
      %2014 = vrot.lane.b32.xlu0 %v2006, 64
      %v2015 = vpop.permute.xlu0 %2014
      %2016 = vrot.lane.b32.xlu0 %v2008, 64
      %v2017 = vpop.permute.xlu0 %2016
      %2018 = vrot.lane.b32.xlu0 %v2010, 64
      %v2019 = vpop.permute.xlu0 %2018
      %2023 = vst.msk [vmem:[#allocation5] sm:$0xff] %vm1667, %v2015
      %2024 = vst.msk [vmem:[#allocation5 + $0x8] sm:$0xff] %vm1667, %v2017
      %vm2025 = vcmask 781824
      %2026 = vst.msk [vmem:[#allocation5 + $0x10] sm:$0xf] %vm2025, %v2019
      %s2027 = scalar_lea.vmem [#allocation4], 3
      %v2028 = vld [vmem:[%s2027] ss:$2 sm:$0xff]
      %s2029 = scalar_lea.vmem [#allocation4], 19
      %v2030 = vld [vmem:[%s2029] ss:$2 sm:$0xff]
      %s2031 = scalar_lea.vmem [#allocation4], 35
      %v2032 = vld [vmem:[%s2031] ss:$2 sm:$0xf]
      %2036 = vrot.lane.b32.xlu0 %v2028, 96
      %v2037 = vpop.permute.xlu0 %2036
      %2038 = vrot.lane.b32.xlu0 %v2030, 96
      %v2039 = vpop.permute.xlu0 %2038
      %2040 = vrot.lane.b32.xlu0 %v2032, 96
      %v2041 = vpop.permute.xlu0 %2040
      %2045 = vst.msk [vmem:[#allocation5] sm:$0xff] %vm1703, %v2037
      %2046 = vst.msk [vmem:[#allocation5 + $0x8] sm:$0xff] %vm1703, %v2039
      %vm2047 = vcmask 1044224
      %2048 = vst.msk [vmem:[#allocation5 + $0x10] sm:$0xf] %vm2047, %v2041
      %v2049 = vld [vmem:[#allocation5] sm:$0xff]
      %v2050 = vld [vmem:[#allocation5 + $0x8] sm:$0xff]
      %v2051 = vld [vmem:[#allocation5 + $0x10] sm:$0xf]
      %v2052 = vld [vmem:[%s3] sm:$0xff]
      %v2053 = vld [vmem:[%s3 + $0x8] sm:$0xff]
      %v2054 = vld [vmem:[%s3 + $0x10] sm:$0xff]
      %v2055 = vld [vmem:[%s3 + $0x18] sm:$0xff]
      %v2056 = vld [vmem:[%s3 + $0x20] sm:$0xff]
      %v2057 = vld [vmem:[%s3 + $0x28] sm:$0xff]
      %v2058 = vld [vmem:[%s3 + $0x30] sm:$0xff]
      %v2059 = vld [vmem:[%s3 + $0x38] sm:$0xff]
      %v2060 = vld [vmem:[%s3 + $0x40] sm:$0xff]
      %v2061 = vld [vmem:[%s3 + $0x48] sm:$0xff]
      %v2062 = vld [vmem:[%s3 + $0x50] sm:$0xff]
      %v2063 = vld [vmem:[%s3 + $0x58] sm:$0xff]
      %v2064 = vld [vmem:[%s3 + $0x60] sm:$0xff]
      %v2065 = vld [vmem:[%s3 + $0x68] sm:$0xff]
      %v2066 = vld [vmem:[%s3 + $0x70] sm:$0xff]
      %v2067 = vld [vmem:[%s3 + $0x78] sm:$0xff]
      %2068 = vmatprep.subr.mxu0 0.0
      %2069 = vmatpush1.msra.mxu0 %v2067
      %2070 = vmatprep.subr.mxu0 0.0
      %2071 = vmatpush1.msra.mxu0 %v2066
      %2072 = vmatprep.subr.mxu0 0.0
      %2073 = vmatpush1.msra.mxu0 %v2065
      %2074 = vmatprep.subr.mxu0 0.0
      %2075 = vmatpush1.msra.mxu0 %v2064
      %2076 = vmatprep.subr.mxu0 0.0
      %2077 = vmatpush1.msra.mxu0 %v2063
      %2078 = vmatprep.subr.mxu0 0.0
      %2079 = vmatpush1.msra.mxu0 %v2062
      %2080 = vmatprep.subr.mxu0 0.0
      %2081 = vmatpush1.msra.mxu0 %v2061
      %2082 = vmatprep.subr.mxu0 0.0
      %2083 = vmatpush1.msra.mxu0 %v2060
      %2084 = vmatprep.subr.mxu0 0.0
      %2085 = vmatpush1.msra.mxu0 %v2059
      %2086 = vmatprep.subr.mxu0 0.0
      %2087 = vmatpush1.msra.mxu0 %v2058
      %2088 = vmatprep.subr.mxu0 0.0
      %2089 = vmatpush1.msra.mxu0 %v2057
      %2090 = vmatprep.subr.mxu0 0.0
      %2091 = vmatpush1.msra.mxu0 %v2056
      %2092 = vmatprep.subr.mxu0 0.0
      %2093 = vmatpush1.msra.mxu0 %v2055
      %2094 = vmatprep.subr.mxu0 0.0
      %2095 = vmatpush1.msra.mxu0 %v2054
      %2096 = vmatprep.subr.mxu0 0.0
      %2097 = vmatpush1.msra.mxu0 %v2053
      %2098 = vmatprep.subr.mxu0 0.0
      %2099 = vmatpush1.msra.mxu0 %v2052
      %2100 = vmatprep.subr.mxu0 0.0
      %2101 = vmatpush2.msra.mxu0 0.0
      %2102 = vmatprep.subr.mxu0 0.0
      %2103 = vmatpush2.msra.mxu0 0.0
      %2104 = vmatprep.subr.mxu0 0.0
      %2105 = vmatpush2.msra.mxu0 0.0
      %2106 = vmatprep.subr.mxu0 0.0
      %2107 = vmatpush2.msra.mxu0 0.0
      %2108 = vmatprep.subr.mxu0 0.0
      %2109 = vmatpush2.msra.mxu0 0.0
      %2110 = vmatprep.subr.mxu0 0.0
      %2111 = vmatpush2.msra.mxu0 0.0
      %2112 = vmatprep.subr.mxu0 0.0
      %2113 = vmatpush2.msra.mxu0 0.0
      %2114 = vmatprep.subr.mxu0 0.0
      %2115 = vmatpush2.msra.mxu0 0.0
      %2116 = vmatprep.subr.mxu0 0.0
      %2117 = vmatpush2.msra.mxu0 0.0
      %2118 = vmatprep.subr.mxu0 0.0
      %2119 = vmatpush2.msra.mxu0 0.0
      %2120 = vmatprep.subr.mxu0 0.0
      %2121 = vmatpush2.msra.mxu0 0.0
      %2122 = vmatprep.subr.mxu0 0.0
      %2123 = vmatpush2.msra.mxu0 0.0
      %2124 = vmatprep.subr.mxu0 0.0
      %2125 = vmatpush2.msra.mxu0 0.0
      %2126 = vmatprep.subr.mxu0 0.0
      %2127 = vmatpush2.msra.mxu0 0.0
      %2128 = vmatprep.subr.mxu0 0.0
      %2129 = vmatpush2.msra.mxu0 0.0
      %2130 = vmatprep.subr.mxu0 0.0
      %2131 = vmatpush2.msra.mxu0 0.0
      %2132 = vmatprep.mubr.f32.mxu0 0.0
      %2133 = vmatmul.mubr.f32.gmra.mxu0 %v2049
      %v2134 = vpop.f32.mrf.mxu0
      %v2135 = vadd.f32 0.0, %v2134
      %v2136 = vpop.f32.mrf.mxu0
      %2137 = vmatprep.mubr.f32.mxu0 0.0
      %2138 = vmatmul.mubr.f32.gmra.mxu0 %v2050
      %v2139 = vpop.f32.mrf.mxu0
      %v2140 = vadd.f32 0.0, %v2139
      %v2141 = vpop.f32.mrf.mxu0
      %2142 = vmatprep.mubr.f32.mxu0 0.0
      %2143 = vmatmul.mubr.f32.gmra.mxu0 %v2051
      %v2144 = vpop.f32.mrf.mxu0
      %v2145 = vadd.f32 0.0, %v2144
      %v2146 = vpop.f32.mrf.mxu0
      %2147 = vdwg.mxu0
      %v2148 = vmax.f32 %v2135, 0.0
      %v2149 = vmax.f32 %v2140, 0.0
      %v2150 = vmax.f32 %v2145, 0.0
      %2151 = vst.msk [vmem:[#allocation6] sm:$0x1] %vm1966, 0.0
      %2152 = vst.msk [vmem:[#allocation6 + $0x1] sm:$0xff] %vm1565, %v2148
      %2153 = vst.msk [vmem:[#allocation6 + $0x9] sm:$0xff] %vm1565, %v2149
      %2154 = vst.msk [vmem:[#allocation6 + $0x11] sm:$0xf] %vm1981, %v2150
      %2155 = vst.msk [vmem:[#allocation6 + $0x15] sm:$0x1] %vm1966, 0.0
      %v2156 = vld [vmem:[#allocation6] ss:$2 sm:$0xff]
      %s2157 = scalar_lea.vmem [#allocation6], 16
      %v2158 = vld [vmem:[%s2157] ss:$2 sm:$0x3]
      %2159 = vst.msk [vmem:[#allocation7] sm:$0xff] %vm1565, %v2156
      %2160 = vst.msk [vmem:[#allocation7 + $0x8] sm:$0x3] %vm1563, %v2158
      %s2161 = scalar_lea.vmem [#allocation6], 1
      %v2162 = vld [vmem:[%s2161] ss:$2 sm:$0xff]
      %s2163 = scalar_lea.vmem [#allocation6], 17
      %v2164 = vld [vmem:[%s2163] ss:$2 sm:$0x3]
      %2167 = vrot.lane.b32.xlu0 %v2162, 32
      %v2168 = vpop.permute.xlu0 %2167
      %2169 = vrot.lane.b32.xlu0 %v2164, 32
      %v2170 = vpop.permute.xlu0 %2169
      %2173 = vst.msk [vmem:[#allocation7] sm:$0xff] %vm1631, %v2168
      %vm2174 = vcmask 517376
      %2175 = vst.msk [vmem:[#allocation7 + $0x8] sm:$0x3] %vm2174, %v2170
      %s2176 = scalar_lea.vmem [#allocation6], 2
      %v2177 = vld [vmem:[%s2176] ss:$2 sm:$0xff]
      %s2178 = scalar_lea.vmem [#allocation6], 18
      %v2179 = vld [vmem:[%s2178] ss:$2 sm:$0x3]
      %2182 = vrot.lane.b32.xlu0 %v2177, 64
      %v2183 = vpop.permute.xlu0 %2182
      %2184 = vrot.lane.b32.xlu0 %v2179, 64
      %v2185 = vpop.permute.xlu0 %2184
      %2188 = vst.msk [vmem:[#allocation7] sm:$0xff] %vm1667, %v2183
      %vm2189 = vcmask 779776
      %2190 = vst.msk [vmem:[#allocation7 + $0x8] sm:$0x3] %vm2189, %v2185
      %s2191 = scalar_lea.vmem [#allocation6], 3
      %v2192 = vld [vmem:[%s2191] ss:$2 sm:$0xff]
      %s2193 = scalar_lea.vmem [#allocation6], 19
      %v2194 = vld [vmem:[%s2193] ss:$2 sm:$0x3]
      %2197 = vrot.lane.b32.xlu0 %v2192, 96
      %v2198 = vpop.permute.xlu0 %2197
      %2199 = vrot.lane.b32.xlu0 %v2194, 96
      %v2200 = vpop.permute.xlu0 %2199
      %2203 = vst.msk [vmem:[#allocation7] sm:$0xff] %vm1703, %v2198
      %vm2204 = vcmask 1042176
      %2205 = vst.msk [vmem:[#allocation7 + $0x8] sm:$0x3] %vm2204, %v2200
      %v2206 = vld [vmem:[#allocation7] sm:$0xff]
      %v2207 = vld [vmem:[#allocation7 + $0x8] sm:$0x3]
      %v2208 = vld [vmem:[%s4] sm:$0xff]
      %v2209 = vld [vmem:[%s4 + $0x8] sm:$0xff]
      %v2210 = vld [vmem:[%s4 + $0x10] sm:$0xff]
      %v2211 = vld [vmem:[%s4 + $0x18] sm:$0xff]
      %v2212 = vld [vmem:[%s4 + $0x20] sm:$0xff]
      %v2213 = vld [vmem:[%s4 + $0x28] sm:$0xff]
      %v2214 = vld [vmem:[%s4 + $0x30] sm:$0xff]
      %v2215 = vld [vmem:[%s4 + $0x38] sm:$0xff]
      %v2216 = vld [vmem:[%s4 + $0x40] sm:$0xff]
      %v2217 = vld [vmem:[%s4 + $0x48] sm:$0xff]
      %v2218 = vld [vmem:[%s4 + $0x50] sm:$0xff]
      %v2219 = vld [vmem:[%s4 + $0x58] sm:$0xff]
      %v2220 = vld [vmem:[%s4 + $0x60] sm:$0xff]
      %v2221 = vld [vmem:[%s4 + $0x68] sm:$0xff]
      %v2222 = vld [vmem:[%s4 + $0x70] sm:$0xff]
      %v2223 = vld [vmem:[%s4 + $0x78] sm:$0xff]
      %2224 = vmatprep.subr.mxu0 0.0
      %2225 = vmatpush1.msra.mxu0 %v2223
      %2226 = vmatprep.subr.mxu0 0.0
      %2227 = vmatpush1.msra.mxu0 %v2222
      %2228 = vmatprep.subr.mxu0 0.0
      %2229 = vmatpush1.msra.mxu0 %v2221
      %2230 = vmatprep.subr.mxu0 0.0
      %2231 = vmatpush1.msra.mxu0 %v2220
      %2232 = vmatprep.subr.mxu0 0.0
      %2233 = vmatpush1.msra.mxu0 %v2219
      %2234 = vmatprep.subr.mxu0 0.0
      %2235 = vmatpush1.msra.mxu0 %v2218
      %2236 = vmatprep.subr.mxu0 0.0
      %2237 = vmatpush1.msra.mxu0 %v2217
      %2238 = vmatprep.subr.mxu0 0.0
      %2239 = vmatpush1.msra.mxu0 %v2216
      %2240 = vmatprep.subr.mxu0 0.0
      %2241 = vmatpush1.msra.mxu0 %v2215
      %2242 = vmatprep.subr.mxu0 0.0
      %2243 = vmatpush1.msra.mxu0 %v2214
      %2244 = vmatprep.subr.mxu0 0.0
      %2245 = vmatpush1.msra.mxu0 %v2213
      %2246 = vmatprep.subr.mxu0 0.0
      %2247 = vmatpush1.msra.mxu0 %v2212
      %2248 = vmatprep.subr.mxu0 0.0
      %2249 = vmatpush1.msra.mxu0 %v2211
      %2250 = vmatprep.subr.mxu0 0.0
      %2251 = vmatpush1.msra.mxu0 %v2210
      %2252 = vmatprep.subr.mxu0 0.0
      %2253 = vmatpush1.msra.mxu0 %v2209
      %2254 = vmatprep.subr.mxu0 0.0
      %2255 = vmatpush1.msra.mxu0 %v2208
      %2256 = vmatprep.subr.mxu0 0.0
      %2257 = vmatpush2.msra.mxu0 0.0
      %2258 = vmatprep.subr.mxu0 0.0
      %2259 = vmatpush2.msra.mxu0 0.0
      %2260 = vmatprep.subr.mxu0 0.0
      %2261 = vmatpush2.msra.mxu0 0.0
      %2262 = vmatprep.subr.mxu0 0.0
      %2263 = vmatpush2.msra.mxu0 0.0
      %2264 = vmatprep.subr.mxu0 0.0
      %2265 = vmatpush2.msra.mxu0 0.0
      %2266 = vmatprep.subr.mxu0 0.0
      %2267 = vmatpush2.msra.mxu0 0.0
      %2268 = vmatprep.subr.mxu0 0.0
      %2269 = vmatpush2.msra.mxu0 0.0
      %2270 = vmatprep.subr.mxu0 0.0
      %2271 = vmatpush2.msra.mxu0 0.0
      %2272 = vmatprep.subr.mxu0 0.0
      %2273 = vmatpush2.msra.mxu0 0.0
      %2274 = vmatprep.subr.mxu0 0.0
      %2275 = vmatpush2.msra.mxu0 0.0
      %2276 = vmatprep.subr.mxu0 0.0
      %2277 = vmatpush2.msra.mxu0 0.0
      %2278 = vmatprep.subr.mxu0 0.0
      %2279 = vmatpush2.msra.mxu0 0.0
      %2280 = vmatprep.subr.mxu0 0.0
      %2281 = vmatpush2.msra.mxu0 0.0
      %2282 = vmatprep.subr.mxu0 0.0
      %2283 = vmatpush2.msra.mxu0 0.0
      %2284 = vmatprep.subr.mxu0 0.0
      %2285 = vmatpush2.msra.mxu0 0.0
      %2286 = vmatprep.subr.mxu0 0.0
      %2287 = vmatpush2.msra.mxu0 0.0
      %2288 = vmatprep.mubr.f32.mxu0 0.0
      %2289 = vmatmul.mubr.f32.gmra.mxu0 %v2206
      %v2290 = vpop.f32.mrf.mxu0
      %v2291 = vadd.f32 0.0, %v2290
      %v2292 = vpop.f32.mrf.mxu0
      %2293 = vmatprep.mubr.f32.mxu0 0.0
      %2294 = vmatmul.mubr.f32.gmra.mxu0 %v2207
      %v2295 = vpop.f32.mrf.mxu0
      %v2296 = vadd.f32 0.0, %v2295
      %v2297 = vpop.f32.mrf.mxu0
      %2298 = vdwg.mxu0
      %v2299 = vmax.f32 %v2291, 0.0
      %v2300 = vmax.f32 %v2296, 0.0
      %2301 = vst.msk [vmem:[#allocation8] sm:$0x1] %vm1966, 0.0
      %2302 = vst.msk [vmem:[#allocation8 + $0x1] sm:$0xff] %vm1565, %v2299
      %2303 = vst.msk [vmem:[#allocation8 + $0x9] sm:$0x3] %vm1563, %v2300
      %2304 = vst.msk [vmem:[#allocation8 + $0xb] sm:$0x1] %vm1966, 0.0
      %v2305 = vld [vmem:[#allocation8] ss:$2 sm:$0x1f]
      %vm2306 = vcmask 258048
      %2307 = vst.msk [vmem:[#allocation9] sm:$0x1f] %vm2306, %v2305
      %s2308 = scalar_lea.vmem [#allocation8], 1
      %v2309 = vld [vmem:[%s2308] ss:$2 sm:$0x1f]
      %2311 = vrot.lane.b32.xlu0 %v2309, 32
      %v2312 = vpop.permute.xlu0 %2311
      %vm2314 = vcmask 520448
      %2315 = vst.msk [vmem:[#allocation9] sm:$0x1f] %vm2314, %v2312
      %s2316 = scalar_lea.vmem [#allocation8], 2
      %v2317 = vld [vmem:[%s2316] ss:$2 sm:$0x1f]
      %2319 = vrot.lane.b32.xlu0 %v2317, 64
      %v2320 = vpop.permute.xlu0 %2319
      %vm2322 = vcmask 782848
      %2323 = vst.msk [vmem:[#allocation9] sm:$0x1f] %vm2322, %v2320
      %s2324 = scalar_lea.vmem [#allocation8], 3
      %v2325 = vld [vmem:[%s2324] ss:$2 sm:$0x1f]
      %2327 = vrot.lane.b32.xlu0 %v2325, 96
      %v2328 = vpop.permute.xlu0 %2327
      %vm2330 = vcmask 1045248
      %2331 = vst.msk [vmem:[#allocation9] sm:$0x1f] %vm2330, %v2328
      %v2332 = vld [vmem:[#allocation9] sm:$0x1f]
      %v2333 = vld [vmem:[%s5] sm:$0xff]
      %v2334 = vld [vmem:[%s5 + $0x8] sm:$0xff]
      %v2335 = vld [vmem:[%s5 + $0x10] sm:$0xff]
      %v2336 = vld [vmem:[%s5 + $0x18] sm:$0xff]
      %v2337 = vld [vmem:[%s5 + $0x20] sm:$0xff]
      %v2338 = vld [vmem:[%s5 + $0x28] sm:$0xff]
      %v2339 = vld [vmem:[%s5 + $0x30] sm:$0xff]
      %v2340 = vld [vmem:[%s5 + $0x38] sm:$0xff]
      %v2341 = vld [vmem:[%s5 + $0x40] sm:$0xff]
      %v2342 = vld [vmem:[%s5 + $0x48] sm:$0xff]
      %v2343 = vld [vmem:[%s5 + $0x50] sm:$0xff]
      %v2344 = vld [vmem:[%s5 + $0x58] sm:$0xff]
      %v2345 = vld [vmem:[%s5 + $0x60] sm:$0xff]
      %v2346 = vld [vmem:[%s5 + $0x68] sm:$0xff]
      %v2347 = vld [vmem:[%s5 + $0x70] sm:$0xff]
      %v2348 = vld [vmem:[%s5 + $0x78] sm:$0xff]
      %2349 = vmatprep.subr.mxu0 0.0
      %2350 = vmatpush1.msra.mxu0 %v2348
      %2351 = vmatprep.subr.mxu0 0.0
      %2352 = vmatpush1.msra.mxu0 %v2347
      %2353 = vmatprep.subr.mxu0 0.0
      %2354 = vmatpush1.msra.mxu0 %v2346
      %2355 = vmatprep.subr.mxu0 0.0
      %2356 = vmatpush1.msra.mxu0 %v2345
      %2357 = vmatprep.subr.mxu0 0.0
      %2358 = vmatpush1.msra.mxu0 %v2344
      %2359 = vmatprep.subr.mxu0 0.0
      %2360 = vmatpush1.msra.mxu0 %v2343
      %2361 = vmatprep.subr.mxu0 0.0
      %2362 = vmatpush1.msra.mxu0 %v2342
      %2363 = vmatprep.subr.mxu0 0.0
      %2364 = vmatpush1.msra.mxu0 %v2341
      %2365 = vmatprep.subr.mxu0 0.0
      %2366 = vmatpush1.msra.mxu0 %v2340
      %2367 = vmatprep.subr.mxu0 0.0
      %2368 = vmatpush1.msra.mxu0 %v2339
      %2369 = vmatprep.subr.mxu0 0.0
      %2370 = vmatpush1.msra.mxu0 %v2338
      %2371 = vmatprep.subr.mxu0 0.0
      %2372 = vmatpush1.msra.mxu0 %v2337
      %2373 = vmatprep.subr.mxu0 0.0
      %2374 = vmatpush1.msra.mxu0 %v2336
      %2375 = vmatprep.subr.mxu0 0.0
      %2376 = vmatpush1.msra.mxu0 %v2335
      %2377 = vmatprep.subr.mxu0 0.0
      %2378 = vmatpush1.msra.mxu0 %v2334
      %2379 = vmatprep.subr.mxu0 0.0
      %2380 = vmatpush1.msra.mxu0 %v2333
      %2381 = vmatprep.subr.mxu0 0.0
      %2382 = vmatpush2.msra.mxu0 0.0
      %2383 = vmatprep.subr.mxu0 0.0
      %2384 = vmatpush2.msra.mxu0 0.0
      %2385 = vmatprep.subr.mxu0 0.0
      %2386 = vmatpush2.msra.mxu0 0.0
      %2387 = vmatprep.subr.mxu0 0.0
      %2388 = vmatpush2.msra.mxu0 0.0
      %2389 = vmatprep.subr.mxu0 0.0
      %2390 = vmatpush2.msra.mxu0 0.0
      %2391 = vmatprep.subr.mxu0 0.0
      %2392 = vmatpush2.msra.mxu0 0.0
      %2393 = vmatprep.subr.mxu0 0.0
      %2394 = vmatpush2.msra.mxu0 0.0
      %2395 = vmatprep.subr.mxu0 0.0
      %2396 = vmatpush2.msra.mxu0 0.0
      %2397 = vmatprep.subr.mxu0 0.0
      %2398 = vmatpush2.msra.mxu0 0.0
      %2399 = vmatprep.subr.mxu0 0.0
      %2400 = vmatpush2.msra.mxu0 0.0
      %2401 = vmatprep.subr.mxu0 0.0
      %2402 = vmatpush2.msra.mxu0 0.0
      %2403 = vmatprep.subr.mxu0 0.0
      %2404 = vmatpush2.msra.mxu0 0.0
      %2405 = vmatprep.subr.mxu0 0.0
      %2406 = vmatpush2.msra.mxu0 0.0
      %2407 = vmatprep.subr.mxu0 0.0
      %2408 = vmatpush2.msra.mxu0 0.0
      %2409 = vmatprep.subr.mxu0 0.0
      %2410 = vmatpush2.msra.mxu0 0.0
      %2411 = vmatprep.subr.mxu0 0.0
      %2412 = vmatpush2.msra.mxu0 0.0
      %2413 = vmatprep.mubr.f32.mxu0 0.0
      %2414 = vmatmul.mubr.f32.gmra.mxu0 %v2332
      %v2415 = vpop.f32.mrf.mxu0
      %v2416 = vadd.f32 0.0, %v2415
      %v2417 = vpop.f32.mrf.mxu0
      %2418 = vdwg.mxu0
      %v2419 = vmax.f32 %v2416, 0.0
      %v2420 = vld [vmem:[%s6] sm:$0xff]
      %v2421 = vld [vmem:[%s6 + $0x8] sm:$0xff]
      %v2422 = vld [vmem:[%s6 + $0x10] sm:$0xff]
      %v2423 = vld [vmem:[%s6 + $0x18] sm:$0xff]
      %v2424 = vld [vmem:[%s7] sm:$0x1]
      %v2426 = vlaneseq
      %v2427 = vshrl.u32 %v2426, 7
      %v2428 = vsub.s32 0, %v2427
      %v2429 = vrot.slane %v2424, %v2428
      %v2432 = vsel %vm1565, %v2419, 0
      %2434 = vmatprep.subr.mxu0 0.0
      %2435 = vmatpush1.msra.mxu0 0.0
      %2436 = vmatprep.subr.mxu0 0.0
      %2437 = vmatpush1.msra.mxu0 0.0
      %2438 = vmatprep.subr.mxu0 0.0
      %2439 = vmatpush1.msra.mxu0 0.0
      %2440 = vmatprep.subr.mxu0 0.0
      %2441 = vmatpush1.msra.mxu0 0.0
      %2442 = vmatprep.subr.mxu0 0.0
      %2443 = vmatpush1.msra.mxu0 0.0
      %2444 = vmatprep.subr.mxu0 0.0
      %2445 = vmatpush1.msra.mxu0 0.0
      %2446 = vmatprep.subr.mxu0 0.0
      %2447 = vmatpush1.msra.mxu0 0.0
      %2448 = vmatprep.subr.mxu0 0.0
      %2449 = vmatpush1.msra.mxu0 0.0
      %2450 = vmatprep.subr.mxu0 0.0
      %2451 = vmatpush1.msra.mxu0 0.0
      %2452 = vmatprep.subr.mxu0 0.0
      %2453 = vmatpush1.msra.mxu0 0.0
      %2454 = vmatprep.subr.mxu0 0.0
      %2455 = vmatpush1.msra.mxu0 0.0
      %2456 = vmatprep.subr.mxu0 0.0
      %2457 = vmatpush1.msra.mxu0 0.0
      %2458 = vmatprep.subr.mxu0 0.0
      %2459 = vmatpush1.msra.mxu0 %v2423
      %2460 = vmatprep.subr.mxu0 0.0
      %2461 = vmatpush1.msra.mxu0 %v2422
      %2462 = vmatprep.subr.mxu0 0.0
      %2463 = vmatpush1.msra.mxu0 %v2421
      %2464 = vmatprep.subr.mxu0 0.0
      %2465 = vmatpush1.msra.mxu0 %v2420
      %2466 = vmatprep.subr.mxu0 0.0
      %2467 = vmatpush2.msra.mxu0 0.0
      %2468 = vmatprep.subr.mxu0 0.0
      %2469 = vmatpush2.msra.mxu0 0.0
      %2470 = vmatprep.subr.mxu0 0.0
      %2471 = vmatpush2.msra.mxu0 0.0
      %2472 = vmatprep.subr.mxu0 0.0
      %2473 = vmatpush2.msra.mxu0 0.0
      %2474 = vmatprep.subr.mxu0 0.0
      %2475 = vmatpush2.msra.mxu0 0.0
      %2476 = vmatprep.subr.mxu0 0.0
      %2477 = vmatpush2.msra.mxu0 0.0
      %2478 = vmatprep.subr.mxu0 0.0
      %2479 = vmatpush2.msra.mxu0 0.0
      %2480 = vmatprep.subr.mxu0 0.0
      %2481 = vmatpush2.msra.mxu0 0.0
      %2482 = vmatprep.subr.mxu0 0.0
      %2483 = vmatpush2.msra.mxu0 0.0
      %2484 = vmatprep.subr.mxu0 0.0
      %2485 = vmatpush2.msra.mxu0 0.0
      %2486 = vmatprep.subr.mxu0 0.0
      %2487 = vmatpush2.msra.mxu0 0.0
      %2488 = vmatprep.subr.mxu0 0.0
      %2489 = vmatpush2.msra.mxu0 0.0
      %2490 = vmatprep.subr.mxu0 0.0
      %2491 = vmatpush2.msra.mxu0 0.0
      %2492 = vmatprep.subr.mxu0 0.0
      %2493 = vmatpush2.msra.mxu0 0.0
      %2494 = vmatprep.subr.mxu0 0.0
      %2495 = vmatpush2.msra.mxu0 0.0
      %2496 = vmatprep.subr.mxu0 0.0
      %2497 = vmatpush2.msra.mxu0 0.0
      %2498 = vmatprep.mubr.f32.mxu0 0.0
      %2499 = vmatmul.mubr.f32.gmra.mxu0 %v2432
      %v2500 = vpop.f32.mrf.mxu0
      %v2501 = vadd.f32 %v2429, %v2500
      %v2502 = vpop.f32.mrf.mxu0
      %2503 = vdwg.mxu0
      %vm2504 = vcmask 315392
      %2505 = vst.msk [vmem:[%s303] sm:$0x1f] %vm2504, %v2501
      %p2506 = scmp.lt.s32.totalorder %s19, 1
      %s2507 = scalar_select %p2506, %s19, 1
      %s2508 = smul.addr %s2507, 8
      %s2509 = scalar_lea.vmem %s8, %s2508
      // Predicated region
      $region53: #{ihc_cpc_forward.1} parent=51 // pred_check
        %p2510 = pneg %p210
      $region54: #{ihc_cpc_forward.1} parent=51 // pred_check_branch
        %2512 = sbr.rel (%p2510) target = $region56
      $region55: #{ihc_cpc_forward.1} parent=51 // pred_region
        _
      $region56: #{ihc_cpc_forward.1} parent=51 // pred_fallthru
        _
    $region52: #{ihc_cpc_forward.1} parent=5 // pred_fallthru
      _
    %p2513 = scmp.le.s32.totalorder 2, %s14
    // Predicated region
    $region57: #{ihc_cpc_forward.1} parent=5 // pred_check
      %p2514 = pneg %p2513
    $region58: #{ihc_cpc_forward.1} parent=5 // pred_check_branch
      %2516 = sbr.rel (%p2514) target = $region60
    $region59: #{ihc_cpc_forward.1} parent=5 // pred_region
      %s2517 = ssub.s32 %s14, 2
      // Predicated region
      $region61: #{ihc_cpc_forward.1} parent=59 // pred_check
        %p2518 = pneg %p216
      $region62: #{ihc_cpc_forward.1} parent=59 // pred_check_branch
        %2520 = sbr.rel (%p2518) target = $region64
      $region63: #{ihc_cpc_forward.1} parent=59 // pred_region
        %p2521 = scmp.lt.s32.totalorder %s20, 1
        %s2522 = scalar_select %p2521, %s20, 1
        %s2523 = smul.addr %s2522, 8
        %s2524 = scalar_lea.vmem %s8, %s2523
      $region64: #{ihc_cpc_forward.1} parent=59 // pred_fallthru
        _
    $region60: #{ihc_cpc_forward.1} parent=5 // pred_fallthru
      _
  $region6: #{ihc_cpc_forward.1} parent=0 // loop_footer
    %s18 = sadd.s32 1, %s14
  $region7: #{ihc_cpc_forward.1} parent=0 // loop_footer_branch
    %13 = sbr.rel target = $region3
  $region8: #{ihc_cpc_forward.1} parent=0 // loop_exit
    _

</llo_original>
